<compile_context>
chip_gen: v5e
topology: v5e:2x2
jax: 0.10.0
libtpu: 0.0.40
codegen_flags: <defaults>
</compile_context>

<pallas_src>
import functools

import jax
import jax.numpy as jnp
from jax.experimental import pallas as pl
from jax.experimental.pallas import tpu as pltpu


def _round_up(v, m):
    return (v + m - 1) // m * m


def _relu(y, leaky):
    if leaky:
        return jnp.where(y >= 0, y, 0.01 * y)
    return jnp.maximum(y, 0.0)


# --------------------------------- kernel ------------------------------------

def fc_model_kernel(x_ref, w1_ref, rw_ref, w2_ref, bias_ref, o_ref, *,
                    num_blocks, leaky):
    """One batch tile of the full fused forward.

    x_ref   : (tb, in_size)            f32 (cast to bf16 in-kernel)
    w1_ref  : (in_size, Np)            bf16, BN scale folded in
    rw_ref  : (num_blocks, 2, Np, Np)  bf16, BN scale folded in
    w2_ref  : (Np, out_pad)            bf16
    bias_ref: (2*num_blocks+2, Fmax)   f32, row 0 = b1, rows 1..2B = residual,
                                       last row = b2 (BN shift folded in)
    o_ref   : (tb, out_pad)
    """
    Np = w1_ref.shape[1]
    out_pad = w2_ref.shape[1]

    # Input projection: Linear(+folded BN) -> ReLU. Dropout is identity (eval).
    x = x_ref[...].astype(jnp.bfloat16)
    y = jnp.dot(x, w1_ref[...], preferred_element_type=jnp.float32)
    y = y + bias_ref[0:1, :Np]
    y = _relu(y, leaky).astype(jnp.bfloat16)          # carry activations in bf16

    # Residual blocks (num_blocks is static -> unrolled at trace time).
    for blk in range(num_blocks):
        r = y                                          # bf16
        z = jnp.dot(r, rw_ref[blk, 0], preferred_element_type=jnp.float32)
        z = z + bias_ref[1 + 2 * blk:2 + 2 * blk, :Np]
        z = _relu(z, leaky).astype(jnp.bfloat16)
        z = jnp.dot(z, rw_ref[blk, 1], preferred_element_type=jnp.float32)
        z = z + bias_ref[2 + 2 * blk:3 + 2 * blk, :Np]
        z = _relu(z, leaky).astype(jnp.bfloat16)
        y = r + z                                      # bf16 residual add

    # Output projection (columns padded to a multiple of 128 -> lane-dense store).
    out = jnp.dot(y, w2_ref[...], preferred_element_type=jnp.float32)
    out = out + bias_ref[2 * num_blocks + 1:2 * num_blocks + 2, :out_pad]
    o_ref[...] = out.astype(o_ref.dtype)


# -------------------------------- wrapper -------------------------------------

def _select_tb(B, tb):
    if tb is None:
        if B >= 16:
            # Target >=2 batch tiles so both v7x TensorCores get work; on
            # single-TC v5e/v6e the extra grid step costs only ~0.35 us.
            tb = _round_up(pl.cdiv(B, 2), 8)
        else:
            tb = _round_up(B, 8)
        tb = min(tb, 512)
    tb = max(8, min(_round_up(tb, 8), _round_up(B, 8)))
    return tb


def fc_model_forward(x, p, *, num_blocks, leaky=False, tb=None,
                     out_dtype=jnp.float32):
    """Run the fused forward. `p` is the dict produced by fold_and_pack().
    Set out_dtype=jnp.bfloat16 if downstream tolerates it (halves output store
    traffic); default f32 matches the PyTorch module."""
    B, in_size = x.shape
    assert in_size == p["in_size"]
    _, Np = p["w1"].shape
    out_pad = p["w2"].shape[1]
    out_size = p["out_size"]
    Fmax = p["bias"].shape[1]
    L = 2 * num_blocks + 2
    assert p["bias"].shape[0] == L

    tb = _select_tb(B, tb)
    Bp = _round_up(B, tb)
    if Bp != B:
        # Ragged batch: pad the batch dim only (feature dim stays unpadded).
        xp = jnp.zeros((Bp, in_size), x.dtype).at[:B].set(x)
    else:
        xp = x                       # no extra host-side pass over the input
    grid = (Bp // tb,)

    kernel = functools.partial(fc_model_kernel, num_blocks=num_blocks, leaky=leaky)

    # ---- exact VMEM budget (bytes), clamped to the real device VMEM ----------
    x_b = jnp.dtype(x.dtype).itemsize
    o_b = jnp.dtype(out_dtype).itemsize
    weight_bytes = 2 * (in_size * Np + num_blocks * 2 * Np * Np + Np * out_pad)  # bf16
    bias_bytes = 4 * _round_up(L, 8) * Fmax                                      # f32 (+sublane pad)

    def vmem_estimate(weight_buffers):
        return (2 * tb * in_size * x_b                 # double-buffered x tile
                + 2 * tb * out_pad * o_b               # double-buffered out tile
                + weight_buffers * (weight_bytes + bias_bytes)
                + 6 * tb * Np * 4                      # working activations / acc
                + 4 * 1024 * 1024)                     # headroom

    try:
        vmem_cap = pltpu.get_tpu_info().vmem_capacity_bytes
    except Exception:
        vmem_cap = 64 * 1024 * 1024                    # v7x worst case

    # TODO(synk): if resident bf16 weights (weight_bytes) ever exceed ~half of
    # vmem_cap (hits v7x at half the size of v5e/v6e), stream residual-block
    # weights per block (extra "arbitrary" grid axis or pltpu.emit_pipeline)
    # instead of keeping them all resident.

    def build(single_buffer):
        wkw = {"pipeline_mode": pl.Buffered(1)} if single_buffer else {}
        full = lambda shape: pl.BlockSpec(shape, lambda i: (0,) * len(shape), **wkw)
        nbuf = 1 if single_buffer else 2
        vmem_limit = int(min(0.85 * vmem_cap,
                             max(vmem_estimate(nbuf), 32 * 1024 * 1024)))
        return pl.pallas_call(
            kernel,
            out_shape=jax.ShapeDtypeStruct((Bp, out_pad), out_dtype),
            grid_spec=pltpu.PrefetchScalarGridSpec(
                num_scalar_prefetch=0,
                grid=grid,
                in_specs=[
                    pl.BlockSpec((tb, in_size), lambda i: (i, 0)),   # x tile
                    full((in_size, Np)),                             # w1 (BN folded), bf16
                    full((num_blocks, 2, Np, Np)),                   # residual weights, bf16
                    full((Np, out_pad)),                             # w2, bf16
                    full((L, Fmax)),                                 # packed biases, f32
                ],
                out_specs=pl.BlockSpec((tb, out_pad), lambda i: (i, 0)),
            ),
            compiler_params=pltpu.CompilerParams(
                dimension_semantics=("parallel",),
                vmem_limit_bytes=vmem_limit,
            ),
        )

    args = (xp, p["w1"], p["rw"], p["w2"], p["bias"])
    try:
        out = build(True)(*args)          # single-buffered loop-invariant weights
    except Exception:
        out = build(False)(*args)         # fallback: default double-buffering

    return out[:B, :out_size]


# ----------------------------- parameter handling -----------------------------

def make_raw_params(key, *, input_size, num_neurons, output_size, num_blocks):
    """Deterministic synthetic f32 parameters (shapes match FCModel.__init__)."""
    ks = iter(jax.random.split(key, 128))
    nxt = lambda: next(ks)

    def linear(in_f, out_f):
        w = jax.random.normal(nxt(), (in_f, out_f), jnp.float32) / jnp.sqrt(in_f)
        b = 0.1 * jax.random.normal(nxt(), (out_f,), jnp.float32)
        return w, b

    def bn(n):  # (gamma, beta, running_mean, running_var) stacked -> (4, n)
        gamma = 1.0 + 0.1 * jax.random.normal(nxt(), (n,), jnp.float32)
        beta = 0.1 * jax.random.normal(nxt(), (n,), jnp.float32)
        mean = 0.1 * jax.random.normal(nxt(), (n,), jnp.float32)
        var = jnp.abs(jax.random.normal(nxt(), (n,), jnp.float32)) + 0.5
        return jnp.stack([gamma, beta, mean, var])

    w1, b1 = linear(input_size, num_neurons)
    bn1 = bn(num_neurons)
    rw, rb, rbn = [], [], []
    for _ in range(num_blocks):
        ws, bs, bns = [], [], []
        for _ in range(2):
            w, b = linear(num_neurons, num_neurons)
            ws.append(w); bs.append(b); bns.append(bn(num_neurons))
        rw.append(jnp.stack(ws)); rb.append(jnp.stack(bs)); rbn.append(jnp.stack(bns))
    w2, b2 = linear(num_neurons, output_size)
    return {"w1": w1, "b1": b1, "bn1": bn1,
            "rw": jnp.stack(rw), "rb": jnp.stack(rb), "rbn": jnp.stack(rbn),
            "w2": w2, "b2": b2}


def fold_and_pack(raw, *, eps=1e-5):
    """Fold eval-mode BatchNorm into the preceding Linear, pad the hidden and
    output feature dims to multiples of 128, cast weights to bf16 and pack all
    biases into a single (2*num_blocks+2, Fmax) f32 operand."""
    def fold(w, b, bn):
        gamma, beta, mean, var = bn[0], bn[1], bn[2], bn[3]
        scale = gamma / jnp.sqrt(var + eps)
        return w * scale[None, :], b * scale + beta - mean * scale

    in_size, N = raw["w1"].shape
    out_size = raw["w2"].shape[1]
    num_blocks = raw["rw"].shape[0]
    Np = _round_up(N, 128)
    out_pad = _round_up(out_size, 128)
    Fmax = max(Np, out_pad)
    L = 2 * num_blocks + 2

    bias = jnp.zeros((L, Fmax), jnp.float32)

    w1, b1 = fold(raw["w1"], raw["b1"], raw["bn1"])
    w1p = jnp.zeros((in_size, Np), jnp.float32).at[:, :N].set(w1)
    bias = bias.at[0, :N].set(b1)

    rw = jnp.zeros((num_blocks, 2, Np, Np), jnp.float32)
    for blk in range(num_blocks):
        for j in range(2):
            w, b = fold(raw["rw"][blk, j], raw["rb"][blk, j], raw["rbn"][blk, j])
            rw = rw.at[blk, j, :N, :N].set(w)
            bias = bias.at[1 + 2 * blk + j, :N].set(b)

    w2p = jnp.zeros((Np, out_pad), jnp.float32).at[:N, :out_size].set(raw["w2"])
    bias = bias.at[2 * num_blocks + 1, :out_size].set(raw["b2"])

    return {"w1": w1p.astype(jnp.bfloat16), "rw": rw.astype(jnp.bfloat16),
            "w2": w2p.astype(jnp.bfloat16), "bias": bias,
            "in_size": int(in_size), "out_size": int(out_size),
            "num_blocks": int(num_blocks)}


# --------------------------------- references ---------------------------------

def reference_forward_matching(x, p, *, num_blocks, leaky=False):
    """Pure-JAX reference mirroring the kernel's bf16 casts / f32 accumulation."""
    f32 = lambda a: a.astype(jnp.float32)
    bf = lambda a: a.astype(jnp.bfloat16)
    act = (lambda v: jnp.where(v >= 0, v, 0.01 * v)) if leaky else (lambda v: jnp.maximum(v, 0.0))
    Np = p["w1"].shape[1]
    out_pad = p["w2"].shape[1]

    y = bf(act(f32(bf(x)) @ f32(p["w1"]) + p["bias"][0:1, :Np]))
    for blk in range(num_blocks):
        r = y
        z = bf(act(f32(r) @ f32(p["rw"][blk, 0]) + p["bias"][1 + 2 * blk:2 + 2 * blk, :Np]))
        z = bf(act(f32(z) @ f32(p["rw"][blk, 1]) + p["bias"][2 + 2 * blk:3 + 2 * blk, :Np]))
        y = r + z
    out = f32(y) @ f32(p["w2"]) + p["bias"][2 * num_blocks + 1:2 * num_blocks + 2, :out_pad]
    return out[:, :p["out_size"]]


def reference_forward_f32(x, raw, *, leaky=False, eps=1e-5):
    """Exact eval-mode FCModel math in f32 (unfolded BN, highest matmul precision)."""
    hi = jax.lax.Precision.HIGHEST
    act = (lambda v: jnp.where(v >= 0, v, 0.01 * v)) if leaky else (lambda v: jnp.maximum(v, 0.0))

    def bn(y, p):
        gamma, beta, mean, var = p[0], p[1], p[2], p[3]
        return (y - mean) / jnp.sqrt(var + eps) * gamma + beta

    y = act(bn(jnp.dot(x, raw["w1"], precision=hi) + raw["b1"], raw["bn1"]))
    for blk in range(raw["rw"].shape[0]):
        z = act(bn(jnp.dot(y, raw["rw"][blk, 0], precision=hi) + raw["rb"][blk, 0],
                   raw["rbn"][blk, 0]))
        z = act(bn(jnp.dot(z, raw["rw"][blk, 1], precision=hi) + raw["rb"][blk, 1],
                   raw["rbn"][blk, 1]))
        y = y + z
    return jnp.dot(y, raw["w2"], precision=hi) + raw["b2"]


if __name__ == "__main__":
    # Small shapes consistent with FCModel(input_size=32, output_size=64).
    B, INPUT_SIZE, NUM_NEURONS, OUTPUT_SIZE, NUM_BLOCKS = 256, 32, 128, 64, 2

    key = jax.random.PRNGKey(0)
    kx, kp = jax.random.split(key)
    x = jax.random.normal(kx, (B, INPUT_SIZE), jnp.float32)
    raw = make_raw_params(kp, input_size=INPUT_SIZE, num_neurons=NUM_NEURONS,
                          output_size=OUTPUT_SIZE, num_blocks=NUM_BLOCKS)
    packed = fold_and_pack(raw)

    # Auto tile selection -> grid of 2 batch tiles (tb=128) at B=256.
    out = fc_model_forward(x, packed, num_blocks=NUM_BLOCKS, leaky=False)
    out = jax.block_until_ready(out)
    assert out.shape == (B, OUTPUT_SIZE)

    ref_bf16 = reference_forward_matching(x, packed, num_blocks=NUM_BLOCKS)
    assert jnp.allclose(out, ref_bf16, atol=1e-2, rtol=1e-2), "mismatch vs bf16 reference"

    ref_f32 = reference_forward_f32(x, raw, leaky=False)
    assert jnp.allclose(out, ref_f32, atol=1e-1, rtol=1e-1), "mismatch vs f32 module reference"

    # Exercise the LeakyReLU path as well.
    out_lk = jax.block_until_ready(
        fc_model_forward(x, packed, num_blocks=NUM_BLOCKS, leaky=True))
    ref_lk = reference_forward_matching(x, packed, num_blocks=NUM_BLOCKS, leaky=True)
    assert jnp.allclose(out_lk, ref_lk, atol=1e-2, rtol=1e-2), "mismatch (leaky) vs bf16 reference"

    print("KERNEL_OK")
</pallas_src>

<mosaic_0001>
module attributes {stable_mosaic.version = 11 : i64} {
  func.func @fc_model_kernel(%arg0: i32, %arg1: memref<128x32xf32, #tpu.memory_space<vmem>>, %arg2: memref<32x128xbf16, #tpu.memory_space<vmem>>, %arg3: memref<2x2x128x128xbf16, #tpu.memory_space<vmem>>, %arg4: memref<128x128xbf16, #tpu.memory_space<vmem>>, %arg5: memref<6x128xf32, #tpu.memory_space<vmem>>, %arg6: memref<128x128xf32, #tpu.memory_space<vmem>>) attributes {dimension_semantics = [#tpu.dimension_semantics<parallel>], iteration_bounds = array<i64: 2>, scalar_prefetch = 0 : i64, scratch_operands = 0 : i64, tpu.core_type = #tpu.core_type<tc>, window_params = [{transform_indices = @transform_0, window_bounds = array<i64: 128, 32>}, {pipeline_mode = #tpu.pipeline_mode<synchronous>, transform_indices = @transform_1, window_bounds = array<i64: 32, 128>}, {pipeline_mode = #tpu.pipeline_mode<synchronous>, transform_indices = @transform_2, window_bounds = array<i64: 2, 2, 128, 128>}, {pipeline_mode = #tpu.pipeline_mode<synchronous>, transform_indices = @transform_3, window_bounds = array<i64: 128, 128>}, {pipeline_mode = #tpu.pipeline_mode<synchronous>, transform_indices = @transform_4, window_bounds = array<i64: 6, 128>}, {transform_indices = @transform_5, window_bounds = array<i64: 128, 128>}]} {
    %c0 = arith.constant 0 : index
    %c0_0 = arith.constant 0 : index
    %0 = vector.load %arg1[%c0, %c0_0] : memref<128x32xf32, #tpu.memory_space<vmem>>, vector<128x32xf32>
    %1 = arith.truncf %0 : vector<128x32xf32> to vector<128x32xbf16>
    %c0_1 = arith.constant 0 : index
    %c0_2 = arith.constant 0 : index
    %2 = vector.load %arg2[%c0_1, %c0_2] : memref<32x128xbf16, #tpu.memory_space<vmem>>, vector<32x128xbf16>
    %cst = arith.constant dense<0.000000e+00> : vector<128x128xf32>
    %3 = tpu.matmul %1, %2, %cst {dimension_numbers = #tpu.dot_dimension_numbers<[1], [0], [0], [1], [0, 0, 1, 1], [], []>} : vector<128x32xbf16>, vector<32x128xbf16>, vector<128x128xf32> -> vector<128x128xf32>
    %c0_3 = arith.constant 0 : index
    %c0_4 = arith.constant 0 : index
    %4 = vector.load %arg5[%c0_3, %c0_4] : memref<6x128xf32, #tpu.memory_space<vmem>>, vector<1x128xf32>
    %5 = vector.broadcast %4 : vector<1x128xf32> to vector<128x128xf32>
    %6 = arith.addf %3, %5 : vector<128x128xf32>
    %cst_5 = arith.constant 0.000000e+00 : f32
    %7 = vector.broadcast %cst_5 : f32 to vector<128x128xf32>
    %8 = arith.maximumf %6, %7 : vector<128x128xf32>
    %9 = arith.truncf %8 : vector<128x128xf32> to vector<128x128xbf16>
    %c0_6 = arith.constant 0 : index
    %c0_7 = arith.constant 0 : index
    %c0_8 = arith.constant 0 : index
    %c0_9 = arith.constant 0 : index
    %10 = vector.load %arg3[%c0_6, %c0_7, %c0_8, %c0_9] : memref<2x2x128x128xbf16, #tpu.memory_space<vmem>>, vector<1x1x128x128xbf16>
    %11 = vector.shape_cast %10 : vector<1x1x128x128xbf16> to vector<128x128xbf16>
    %cst_10 = arith.constant dense<0.000000e+00> : vector<128x128xf32>
    %12 = tpu.matmul %9, %11, %cst_10 {dimension_numbers = #tpu.dot_dimension_numbers<[1], [0], [0], [1], [0, 0, 1, 1], [], []>} : vector<128x128xbf16>, vector<128x128xbf16>, vector<128x128xf32> -> vector<128x128xf32>
    %c1 = arith.constant 1 : index
    %c0_11 = arith.constant 0 : index
    %13 = vector.load %arg5[%c1, %c0_11] : memref<6x128xf32, #tpu.memory_space<vmem>>, vector<1x128xf32>
    %14 = vector.broadcast %13 : vector<1x128xf32> to vector<128x128xf32>
    %15 = arith.addf %12, %14 : vector<128x128xf32>
    %cst_12 = arith.constant 0.000000e+00 : f32
    %16 = vector.broadcast %cst_12 : f32 to vector<128x128xf32>
    %17 = arith.maximumf %15, %16 : vector<128x128xf32>
    %18 = arith.truncf %17 : vector<128x128xf32> to vector<128x128xbf16>
    %c0_13 = arith.constant 0 : index
    %c1_14 = arith.constant 1 : index
    %c0_15 = arith.constant 0 : index
    %c0_16 = arith.constant 0 : index
    %19 = vector.load %arg3[%c0_13, %c1_14, %c0_15, %c0_16] : memref<2x2x128x128xbf16, #tpu.memory_space<vmem>>, vector<1x1x128x128xbf16>
    %20 = vector.shape_cast %19 : vector<1x1x128x128xbf16> to vector<128x128xbf16>
    %cst_17 = arith.constant dense<0.000000e+00> : vector<128x128xf32>
    %21 = tpu.matmul %18, %20, %cst_17 {dimension_numbers = #tpu.dot_dimension_numbers<[1], [0], [0], [1], [0, 0, 1, 1], [], []>} : vector<128x128xbf16>, vector<128x128xbf16>, vector<128x128xf32> -> vector<128x128xf32>
    %c2 = arith.constant 2 : index
    %c0_18 = arith.constant 0 : index
    %22 = vector.load %arg5[%c2, %c0_18] : memref<6x128xf32, #tpu.memory_space<vmem>>, vector<1x128xf32>
    %23 = vector.broadcast %22 : vector<1x128xf32> to vector<128x128xf32>
    %24 = arith.addf %21, %23 : vector<128x128xf32>
    %cst_19 = arith.constant 0.000000e+00 : f32
    %25 = vector.broadcast %cst_19 : f32 to vector<128x128xf32>
    %26 = arith.maximumf %24, %25 : vector<128x128xf32>
    %27 = arith.truncf %26 : vector<128x128xf32> to vector<128x128xbf16>
    %28 = arith.addf %9, %27 : vector<128x128xbf16>
    %c1_20 = arith.constant 1 : index
    %c0_21 = arith.constant 0 : index
    %c0_22 = arith.constant 0 : index
    %c0_23 = arith.constant 0 : index
    %29 = vector.load %arg3[%c1_20, %c0_21, %c0_22, %c0_23] : memref<2x2x128x128xbf16, #tpu.memory_space<vmem>>, vector<1x1x128x128xbf16>
    %30 = vector.shape_cast %29 : vector<1x1x128x128xbf16> to vector<128x128xbf16>
    %cst_24 = arith.constant dense<0.000000e+00> : vector<128x128xf32>
    %31 = tpu.matmul %28, %30, %cst_24 {dimension_numbers = #tpu.dot_dimension_numbers<[1], [0], [0], [1], [0, 0, 1, 1], [], []>} : vector<128x128xbf16>, vector<128x128xbf16>, vector<128x128xf32> -> vector<128x128xf32>
    %c3 = arith.constant 3 : index
    %c0_25 = arith.constant 0 : index
    %32 = vector.load %arg5[%c3, %c0_25] : memref<6x128xf32, #tpu.memory_space<vmem>>, vector<1x128xf32>
    %33 = vector.broadcast %32 : vector<1x128xf32> to vector<128x128xf32>
    %34 = arith.addf %31, %33 : vector<128x128xf32>
    %cst_26 = arith.constant 0.000000e+00 : f32
    %35 = vector.broadcast %cst_26 : f32 to vector<128x128xf32>
    %36 = arith.maximumf %34, %35 : vector<128x128xf32>
    %37 = arith.truncf %36 : vector<128x128xf32> to vector<128x128xbf16>
    %c1_27 = arith.constant 1 : index
    %c1_28 = arith.constant 1 : index
    %c0_29 = arith.constant 0 : index
    %c0_30 = arith.constant 0 : index
    %38 = vector.load %arg3[%c1_27, %c1_28, %c0_29, %c0_30] : memref<2x2x128x128xbf16, #tpu.memory_space<vmem>>, vector<1x1x128x128xbf16>
    %39 = vector.shape_cast %38 : vector<1x1x128x128xbf16> to vector<128x128xbf16>
    %cst_31 = arith.constant dense<0.000000e+00> : vector<128x128xf32>
    %40 = tpu.matmul %37, %39, %cst_31 {dimension_numbers = #tpu.dot_dimension_numbers<[1], [0], [0], [1], [0, 0, 1, 1], [], []>} : vector<128x128xbf16>, vector<128x128xbf16>, vector<128x128xf32> -> vector<128x128xf32>
    %c4 = arith.constant 4 : index
    %c0_32 = arith.constant 0 : index
    %41 = vector.load %arg5[%c4, %c0_32] : memref<6x128xf32, #tpu.memory_space<vmem>>, vector<1x128xf32>
    %42 = vector.broadcast %41 : vector<1x128xf32> to vector<128x128xf32>
    %43 = arith.addf %40, %42 : vector<128x128xf32>
    %cst_33 = arith.constant 0.000000e+00 : f32
    %44 = vector.broadcast %cst_33 : f32 to vector<128x128xf32>
    %45 = arith.maximumf %43, %44 : vector<128x128xf32>
    %46 = arith.truncf %45 : vector<128x128xf32> to vector<128x128xbf16>
    %47 = arith.addf %28, %46 : vector<128x128xbf16>
    %c0_34 = arith.constant 0 : index
    %c0_35 = arith.constant 0 : index
    %48 = vector.load %arg4[%c0_34, %c0_35] : memref<128x128xbf16, #tpu.memory_space<vmem>>, vector<128x128xbf16>
    %cst_36 = arith.constant dense<0.000000e+00> : vector<128x128xf32>
    %49 = tpu.matmul %47, %48, %cst_36 {dimension_numbers = #tpu.dot_dimension_numbers<[1], [0], [0], [1], [0, 0, 1, 1], [], []>} : vector<128x128xbf16>, vector<128x128xbf16>, vector<128x128xf32> -> vector<128x128xf32>
    %c5 = arith.constant 5 : index
    %c0_37 = arith.constant 0 : index
    %50 = vector.load %arg5[%c5, %c0_37] : memref<6x128xf32, #tpu.memory_space<vmem>>, vector<1x128xf32>
    %51 = vector.broadcast %50 : vector<1x128xf32> to vector<128x128xf32>
    %52 = arith.addf %49, %51 : vector<128x128xf32>
    %c0_38 = arith.constant 0 : index
    %c0_39 = arith.constant 0 : index
    %53 = vector.load %arg6[%c0_38, %c0_39] : memref<128x128xf32, #tpu.memory_space<vmem>>, vector<128x128xf32>
    tpu.vector_store %arg6[%c0_38, %c0_39], %52 {strides = array<i32>} : memref<128x128xf32, #tpu.memory_space<vmem>>, vector<128x128xf32>,
    return
  }
  func.func @transform_0(%arg0: i32) -> (i32, i32) {
    %c0_i32 = arith.constant 0 : i32
    %c0_i32_0 = arith.constant 0 : i32
    return %arg0, %c0_i32 : i32, i32
  }
  func.func @transform_1(%arg0: i32) -> (i32, i32) {
    %c0_i32 = arith.constant 0 : i32
    %c0_i32_0 = arith.constant 0 : i32
    %c0_i32_1 = arith.constant 0 : i32
    return %c0_i32, %c0_i32_0 : i32, i32
  }
  func.func @transform_2(%arg0: i32) -> (i32, i32, i32, i32) {
    %c0_i32 = arith.constant 0 : i32
    %c0_i32_0 = arith.constant 0 : i32
    %c0_i32_1 = arith.constant 0 : i32
    %c0_i32_2 = arith.constant 0 : i32
    %c0_i32_3 = arith.constant 0 : i32
    return %c0_i32, %c0_i32_0, %c0_i32_1, %c0_i32_2 : i32, i32, i32, i32
  }
  func.func @transform_3(%arg0: i32) -> (i32, i32) {
    %c0_i32 = arith.constant 0 : i32
    %c0_i32_0 = arith.constant 0 : i32
    %c0_i32_1 = arith.constant 0 : i32
    return %c0_i32, %c0_i32_0 : i32, i32
  }
  func.func @transform_4(%arg0: i32) -> (i32, i32) {
    %c0_i32 = arith.constant 0 : i32
    %c0_i32_0 = arith.constant 0 : i32
    %c0_i32_1 = arith.constant 0 : i32
    return %c0_i32, %c0_i32_0 : i32, i32
  }
  func.func @transform_5(%arg0: i32) -> (i32, i32) {
    %c0_i32 = arith.constant 0 : i32
    %c0_i32_0 = arith.constant 0 : i32
    return %arg0, %c0_i32 : i32, i32
  }
}

module attributes {stable_mosaic.version = 11 : i64} {
  func.func @fc_model_kernel(%arg0: i32, %arg1: memref<128x32xf32, #tpu.memory_space<vmem>>, %arg2: memref<32x128xbf16, #tpu.memory_space<vmem>>, %arg3: memref<2x2x128x128xbf16, #tpu.memory_space<vmem>>, %arg4: memref<128x128xbf16, #tpu.memory_space<vmem>>, %arg5: memref<6x128xf32, #tpu.memory_space<vmem>>, %arg6: memref<128x128xf32, #tpu.memory_space<vmem>>) attributes {dimension_semantics = [#tpu.dimension_semantics<parallel>], iteration_bounds = array<i64: 2>, scalar_prefetch = 0 : i64, scratch_operands = 0 : i64, tpu.core_type = #tpu.core_type<tc>, window_params = [{transform_indices = @transform_0, window_bounds = array<i64: 128, 32>}, {pipeline_mode = #tpu.pipeline_mode<synchronous>, transform_indices = @transform_1, window_bounds = array<i64: 32, 128>}, {pipeline_mode = #tpu.pipeline_mode<synchronous>, transform_indices = @transform_2, window_bounds = array<i64: 2, 2, 128, 128>}, {pipeline_mode = #tpu.pipeline_mode<synchronous>, transform_indices = @transform_3, window_bounds = array<i64: 128, 128>}, {pipeline_mode = #tpu.pipeline_mode<synchronous>, transform_indices = @transform_4, window_bounds = array<i64: 6, 128>}, {transform_indices = @transform_5, window_bounds = array<i64: 128, 128>}]} {
    %c0 = arith.constant 0 : index
    %c0_0 = arith.constant 0 : index
    %0 = vector.load %arg1[%c0, %c0_0] : memref<128x32xf32, #tpu.memory_space<vmem>>, vector<128x32xf32>
    %1 = arith.truncf %0 : vector<128x32xf32> to vector<128x32xbf16>
    %c0_1 = arith.constant 0 : index
    %c0_2 = arith.constant 0 : index
    %2 = vector.load %arg2[%c0_1, %c0_2] : memref<32x128xbf16, #tpu.memory_space<vmem>>, vector<32x128xbf16>
    %cst = arith.constant dense<0.000000e+00> : vector<128x128xf32>
    %3 = tpu.matmul %1, %2, %cst {dimension_numbers = #tpu.dot_dimension_numbers<[1], [0], [0], [1], [0, 0, 1, 1], [], []>} : vector<128x32xbf16>, vector<32x128xbf16>, vector<128x128xf32> -> vector<128x128xf32>
    %c0_3 = arith.constant 0 : index
    %c0_4 = arith.constant 0 : index
    %4 = vector.load %arg5[%c0_3, %c0_4] : memref<6x128xf32, #tpu.memory_space<vmem>>, vector<1x128xf32>
    %5 = vector.broadcast %4 : vector<1x128xf32> to vector<128x128xf32>
    %6 = arith.addf %3, %5 : vector<128x128xf32>
    %cst_5 = arith.constant 0.000000e+00 : f32
    %7 = vector.broadcast %cst_5 : f32 to vector<128x128xf32>
    %8 = arith.maximumf %6, %7 : vector<128x128xf32>
    %9 = arith.truncf %8 : vector<128x128xf32> to vector<128x128xbf16>
    %c0_6 = arith.constant 0 : index
    %c0_7 = arith.constant 0 : index
    %c0_8 = arith.constant 0 : index
    %c0_9 = arith.constant 0 : index
    %10 = vector.load %arg3[%c0_6, %c0_7, %c0_8, %c0_9] : memref<2x2x128x128xbf16, #tpu.memory_space<vmem>>, vector<1x1x128x128xbf16>
    %11 = vector.shape_cast %10 : vector<1x1x128x128xbf16> to vector<128x128xbf16>
    %cst_10 = arith.constant dense<0.000000e+00> : vector<128x128xf32>
    %12 = tpu.matmul %9, %11, %cst_10 {dimension_numbers = #tpu.dot_dimension_numbers<[1], [0], [0], [1], [0, 0, 1, 1], [], []>} : vector<128x128xbf16>, vector<128x128xbf16>, vector<128x128xf32> -> vector<128x128xf32>
    %c1 = arith.constant 1 : index
    %c0_11 = arith.constant 0 : index
    %13 = vector.load %arg5[%c1, %c0_11] : memref<6x128xf32, #tpu.memory_space<vmem>>, vector<1x128xf32>
    %14 = vector.broadcast %13 : vector<1x128xf32> to vector<128x128xf32>
    %15 = arith.addf %12, %14 : vector<128x128xf32>
    %cst_12 = arith.constant 0.000000e+00 : f32
    %16 = vector.broadcast %cst_12 : f32 to vector<128x128xf32>
    %17 = arith.maximumf %15, %16 : vector<128x128xf32>
    %18 = arith.truncf %17 : vector<128x128xf32> to vector<128x128xbf16>
    %c0_13 = arith.constant 0 : index
    %c1_14 = arith.constant 1 : index
    %c0_15 = arith.constant 0 : index
    %c0_16 = arith.constant 0 : index
    %19 = vector.load %arg3[%c0_13, %c1_14, %c0_15, %c0_16] : memref<2x2x128x128xbf16, #tpu.memory_space<vmem>>, vector<1x1x128x128xbf16>
    %20 = vector.shape_cast %19 : vector<1x1x128x128xbf16> to vector<128x128xbf16>
    %cst_17 = arith.constant dense<0.000000e+00> : vector<128x128xf32>
    %21 = tpu.matmul %18, %20, %cst_17 {dimension_numbers = #tpu.dot_dimension_numbers<[1], [0], [0], [1], [0, 0, 1, 1], [], []>} : vector<128x128xbf16>, vector<128x128xbf16>, vector<128x128xf32> -> vector<128x128xf32>
    %c2 = arith.constant 2 : index
    %c0_18 = arith.constant 0 : index
    %22 = vector.load %arg5[%c2, %c0_18] : memref<6x128xf32, #tpu.memory_space<vmem>>, vector<1x128xf32>
    %23 = vector.broadcast %22 : vector<1x128xf32> to vector<128x128xf32>
    %24 = arith.addf %21, %23 : vector<128x128xf32>
    %cst_19 = arith.constant 0.000000e+00 : f32
    %25 = vector.broadcast %cst_19 : f32 to vector<128x128xf32>
    %26 = arith.maximumf %24, %25 : vector<128x128xf32>
    %27 = arith.truncf %26 : vector<128x128xf32> to vector<128x128xbf16>
    %28 = arith.addf %9, %27 : vector<128x128xbf16>
    %c1_20 = arith.constant 1 : index
    %c0_21 = arith.constant 0 : index
    %c0_22 = arith.constant 0 : index
    %c0_23 = arith.constant 0 : index
    %29 = vector.load %arg3[%c1_20, %c0_21, %c0_22, %c0_23] : memref<2x2x128x128xbf16, #tpu.memory_space<vmem>>, vector<1x1x128x128xbf16>
    %30 = vector.shape_cast %29 : vector<1x1x128x128xbf16> to vector<128x128xbf16>
    %cst_24 = arith.constant dense<0.000000e+00> : vector<128x128xf32>
    %31 = tpu.matmul %28, %30, %cst_24 {dimension_numbers = #tpu.dot_dimension_numbers<[1], [0], [0], [1], [0, 0, 1, 1], [], []>} : vector<128x128xbf16>, vector<128x128xbf16>, vector<128x128xf32> -> vector<128x128xf32>
    %c3 = arith.constant 3 : index
    %c0_25 = arith.constant 0 : index
    %32 = vector.load %arg5[%c3, %c0_25] : memref<6x128xf32, #tpu.memory_space<vmem>>, vector<1x128xf32>
    %33 = vector.broadcast %32 : vector<1x128xf32> to vector<128x128xf32>
    %34 = arith.addf %31, %33 : vector<128x128xf32>
    %cst_26 = arith.constant 0.000000e+00 : f32
    %35 = vector.broadcast %cst_26 : f32 to vector<128x128xf32>
    %36 = arith.maximumf %34, %35 : vector<128x128xf32>
    %37 = arith.truncf %36 : vector<128x128xf32> to vector<128x128xbf16>
    %c1_27 = arith.constant 1 : index
    %c1_28 = arith.constant 1 : index
    %c0_29 = arith.constant 0 : index
    %c0_30 = arith.constant 0 : index
    %38 = vector.load %arg3[%c1_27, %c1_28, %c0_29, %c0_30] : memref<2x2x128x128xbf16, #tpu.memory_space<vmem>>, vector<1x1x128x128xbf16>
    %39 = vector.shape_cast %38 : vector<1x1x128x128xbf16> to vector<128x128xbf16>
    %cst_31 = arith.constant dense<0.000000e+00> : vector<128x128xf32>
    %40 = tpu.matmul %37, %39, %cst_31 {dimension_numbers = #tpu.dot_dimension_numbers<[1], [0], [0], [1], [0, 0, 1, 1], [], []>} : vector<128x128xbf16>, vector<128x128xbf16>, vector<128x128xf32> -> vector<128x128xf32>
    %c4 = arith.constant 4 : index
    %c0_32 = arith.constant 0 : index
    %41 = vector.load %arg5[%c4, %c0_32] : memref<6x128xf32, #tpu.memory_space<vmem>>, vector<1x128xf32>
    %42 = vector.broadcast %41 : vector<1x128xf32> to vector<128x128xf32>
    %43 = arith.addf %40, %42 : vector<128x128xf32>
    %cst_33 = arith.constant 0.000000e+00 : f32
    %44 = vector.broadcast %cst_33 : f32 to vector<128x128xf32>
    %45 = arith.maximumf %43, %44 : vector<128x128xf32>
    %46 = arith.truncf %45 : vector<128x128xf32> to vector<128x128xbf16>
    %47 = arith.addf %28, %46 : vector<128x128xbf16>
    %c0_34 = arith.constant 0 : index
    %c0_35 = arith.constant 0 : index
    %48 = vector.load %arg4[%c0_34, %c0_35] : memref<128x128xbf16, #tpu.memory_space<vmem>>, vector<128x128xbf16>
    %cst_36 = arith.constant dense<0.000000e+00> : vector<128x128xf32>
    %49 = tpu.matmul %47, %48, %cst_36 {dimension_numbers = #tpu.dot_dimension_numbers<[1], [0], [0], [1], [0, 0, 1, 1], [], []>} : vector<128x128xbf16>, vector<128x128xbf16>, vector<128x128xf32> -> vector<128x128xf32>
    %c5 = arith.constant 5 : index
    %c0_37 = arith.constant 0 : index
    %50 = vector.load %arg5[%c5, %c0_37] : memref<6x128xf32, #tpu.memory_space<vmem>>, vector<1x128xf32>
    %51 = vector.broadcast %50 : vector<1x128xf32> to vector<128x128xf32>
    %52 = arith.addf %49, %51 : vector<128x128xf32>
    %c0_38 = arith.constant 0 : index
    %c0_39 = arith.constant 0 : index
    %53 = vector.load %arg6[%c0_38, %c0_39] : memref<128x128xf32, #tpu.memory_space<vmem>>, vector<128x128xf32>
    tpu.vector_store %arg6[%c0_38, %c0_39], %52 {strides = array<i32>} : memref<128x128xf32, #tpu.memory_space<vmem>>, vector<128x128xf32>,
    return
  }
  func.func @transform_0(%arg0: i32) -> (i32, i32) {
    %c0_i32 = arith.constant 0 : i32
    %c0_i32_0 = arith.constant 0 : i32
    return %arg0, %c0_i32 : i32, i32
  }
  func.func @transform_1(%arg0: i32) -> (i32, i32) {
    %c0_i32 = arith.constant 0 : i32
    %c0_i32_0 = arith.constant 0 : i32
    %c0_i32_1 = arith.constant 0 : i32
    return %c0_i32, %c0_i32_0 : i32, i32
  }
  func.func @transform_2(%arg0: i32) -> (i32, i32, i32, i32) {
    %c0_i32 = arith.constant 0 : i32
    %c0_i32_0 = arith.constant 0 : i32
    %c0_i32_1 = arith.constant 0 : i32
    %c0_i32_2 = arith.constant 0 : i32
    %c0_i32_3 = arith.constant 0 : i32
    return %c0_i32, %c0_i32_0, %c0_i32_1, %c0_i32_2 : i32, i32, i32, i32
  }
  func.func @transform_3(%arg0: i32) -> (i32, i32) {
    %c0_i32 = arith.constant 0 : i32
    %c0_i32_0 = arith.constant 0 : i32
    %c0_i32_1 = arith.constant 0 : i32
    return %c0_i32, %c0_i32_0 : i32, i32
  }
  func.func @transform_4(%arg0: i32) -> (i32, i32) {
    %c0_i32 = arith.constant 0 : i32
    %c0_i32_0 = arith.constant 0 : i32
    %c0_i32_1 = arith.constant 0 : i32
    return %c0_i32, %c0_i32_0 : i32, i32
  }
  func.func @transform_5(%arg0: i32) -> (i32, i32) {
    %c0_i32 = arith.constant 0 : i32
    %c0_i32_0 = arith.constant 0 : i32
    return %arg0, %c0_i32 : i32, i32
  }
}

</mosaic_0001>

<llo_original>
// kernel: tpu_custom_call.1
$region0: #{tpu_custom_call.1}
  #allocation0 [shape = 'u32[]', space=smem, size = 0x4, offset = 0x4, fixed_abs, tag = 'smem constant byte address 0x4 - core index']
  #allocation1 [shape = 'u32[72,128]{1,0:T(1,128)}', space=vmem, size = 0x9000, scoped, tag = 'internal scratch']
  %s0 = inlined_call_operand.vmem [shape: f32[256,32], index: 0, kind: input, shape index: {}]
  %s1 = inlined_call_operand.hbm [shape: bf16[32,128], index: 1, kind: input, shape index: {}]
  %s2 = inlined_call_operand.vmem [shape: bf16[2,2,128,128], index: 2, kind: input, shape index: {}]
  %s3 = inlined_call_operand.vmem [shape: bf16[128,128], index: 3, kind: input, shape index: {}]
  %s4 = inlined_call_operand.hbm [shape: f32[6,128], index: 4, kind: input, shape index: {}]
  %s5 = inlined_call_operand.hbm [shape: f32[256,128], index: 5, kind: output, shape index: {}]
  %s6 = sld [smem:[#allocation0]]
  $region61: #{tpu_custom_call.1} parent=0
    _
  %s8 = ssub.s32 1, %s6
  %s9 = scalar_select 0, %s8, %s6
  $region1: #{tpu_custom_call.1} parent=0
    #allocation2 [shape = 'u8[8192]{0}', space=vmem, size = 0x2000, scoped, tag = 'input window, operand 1, single buffered']
    #allocation3 [shape = 's32[2]{0}', space=sflag, size = 0x8, scoped, tag = 'scoped memory for tpu_custom_call.1']
    #allocation4 [shape = 's32[2]{0}', space=sflag, size = 0x8, scoped, tag = 'scoped memory for tpu_custom_call.1']
    #allocation5 [shape = 'u8[4096]{0}', space=vmem, size = 0x1000, scoped, tag = 'input window, operand 4, single buffered']
    #allocation6 [shape = 's32[1]{0}', space=sflag, size = 0x4, scoped, tag = 'scoped memory for tpu_custom_call.1']
    #allocation7 [shape = 'u8[131072]{0}', space=vmem, size = 0x20000, scoped, tag = 'output window, operand 0']
    %10 = vsyncpa [#allocation3], 0
    %11 = vsyncpa [#allocation6], 0
    %12 = vsyncpa [#allocation4], 0
    %s13 = scalar_lea.sflag [#allocation4], 1
    %14 = vsyncpa %s13, 0
    loop: start=0, step=1, limit=4
    $region2: #{tpu_custom_call.1} parent=1 // loop_pre_header
      _
    $region3: #{tpu_custom_call.1} parent=1 // loop_header
      %s16 = sphi 0, %s20
      %p17 = scmp.ge.s32.totalorder %s16, 4
      %s26 = sphi 0, %s28
      %s29 = sphi 0, %s26
      %s30 = sphi 0, %s29
      %s46 = sphi 0, %s30
      %s50 = sphi 0, %s50
      %s52 = sphi 0, %s50
      %s53 = sphi 0, %s52
      %s67 = sphi 0, %s53
      %s71 = sphi 0, %s71
      %s73 = sphi 0, %s71
      %s74 = sphi 0, %s73
      %s88 = sphi 0, %s74
      %s92 = sphi 0, %s92
      %s94 = sphi 0, %s92
      %s95 = sphi 0, %s94
      %s109 = sphi 0, %s95
      %s113 = sphi 0, %s113
      %s115 = sphi 0, %s113
      %s116 = sphi 0, %s115
      %s130 = sphi 0, %s116
      %s136 = sphi 0, %s138
      %s139 = sphi 0, %s136
      %s140 = sphi 0, %s139
      %s156 = sphi 0, %s140
    $region4: #{tpu_custom_call.1} parent=1 // loop_header_branch
      %19 = sbr.rel (%p17) target = $region8
    $region5: #{tpu_custom_call.1} parent=1 // loop_body
      %s21 = ssub.s32 %s16, 1
      %s22 = ssub.s32 %s16, 2
      %s23 = sadd.s32 %s16, 1
      %s24 = ssub.s32 %s16, %s23
      %p25 = scmp.eq.s32.totalorder %s24, 0
      %s27 = sadd.s32 %s26, 1
      %s28 = scalar_select %p25, %s26, %s27
      %p31 = pneg %p25
      %p32 = scmp.eq.s32.totalorder %s16, 1
      %p33 = por %p31, %p32
      %p34 = scmp.ne.s32.totalorder %s26, %s29
      %p35 = scmp.eq.s32.totalorder %s16, 0
      %p36 = por %p34, %p35
      %p37 = scmp.ne.s32.totalorder %s26, %s29
      %p38 = scmp.eq.s32.totalorder %s21, 1
      %p39 = por %p37, %p38
      %p40 = scmp.ne.s32.totalorder %s29, %s30
      %p41 = scmp.eq.s32.totalorder %s21, 0
      %p42 = por %p40, %p41
      %p43 = scmp.ne.s32.totalorder %s29, %s30
      %p44 = scmp.eq.s32.totalorder %s22, 1
      %p45 = por %p43, %p44
      %p47 = scmp.ne.s32.totalorder %s30, %s46
      %p48 = scmp.eq.s32.totalorder %s22, 0
      %p49 = por %p47, %p48
      %s51 = sadd.s32 %s50, 1
      %p54 = scmp.eq.s32.totalorder %s16, 1
      %p55 = scmp.ne.s32.totalorder %s50, %s52
      %p56 = scmp.eq.s32.totalorder %s16, 0
      %p57 = por %p55, %p56
      %p58 = scmp.ne.s32.totalorder %s50, %s52
      %p59 = scmp.eq.s32.totalorder %s21, 1
      %p60 = por %p58, %p59
      %p61 = scmp.ne.s32.totalorder %s52, %s53
      %p62 = scmp.eq.s32.totalorder %s21, 0
      %p63 = por %p61, %p62
      %p64 = scmp.ne.s32.totalorder %s52, %s53
      %p65 = scmp.eq.s32.totalorder %s22, 1
      %p66 = por %p64, %p65
      %p68 = scmp.ne.s32.totalorder %s53, %s67
      %p69 = scmp.eq.s32.totalorder %s22, 0
      %p70 = por %p68, %p69
      %s72 = sadd.s32 %s71, 1
      %p75 = scmp.eq.s32.totalorder %s16, 1
      %p76 = scmp.ne.s32.totalorder %s71, %s73
      %p77 = scmp.eq.s32.totalorder %s16, 0
      %p78 = por %p76, %p77
      %p79 = scmp.ne.s32.totalorder %s71, %s73
      %p80 = scmp.eq.s32.totalorder %s21, 1
      %p81 = por %p79, %p80
      %p82 = scmp.ne.s32.totalorder %s73, %s74
      %p83 = scmp.eq.s32.totalorder %s21, 0
      %p84 = por %p82, %p83
      %p85 = scmp.ne.s32.totalorder %s73, %s74
      %p86 = scmp.eq.s32.totalorder %s22, 1
      %p87 = por %p85, %p86
      %p89 = scmp.ne.s32.totalorder %s74, %s88
      %p90 = scmp.eq.s32.totalorder %s22, 0
      %p91 = por %p89, %p90
      %s93 = sadd.s32 %s92, 1
      %p96 = scmp.eq.s32.totalorder %s16, 1
      %p97 = scmp.ne.s32.totalorder %s92, %s94
      %p98 = scmp.eq.s32.totalorder %s16, 0
      %p99 = por %p97, %p98
      %p100 = scmp.ne.s32.totalorder %s92, %s94
      %p101 = scmp.eq.s32.totalorder %s21, 1
      %p102 = por %p100, %p101
      %p103 = scmp.ne.s32.totalorder %s94, %s95
      %p104 = scmp.eq.s32.totalorder %s21, 0
      %p105 = por %p103, %p104
      %p106 = scmp.ne.s32.totalorder %s94, %s95
      %p107 = scmp.eq.s32.totalorder %s22, 1
      %p108 = por %p106, %p107
      %p110 = scmp.ne.s32.totalorder %s95, %s109
      %p111 = scmp.eq.s32.totalorder %s22, 0
      %p112 = por %p110, %p111
      %s114 = sadd.s32 %s113, 1
      %p117 = scmp.eq.s32.totalorder %s16, 1
      %p118 = scmp.ne.s32.totalorder %s113, %s115
      %p119 = scmp.eq.s32.totalorder %s16, 0
      %p120 = por %p118, %p119
      %p121 = scmp.ne.s32.totalorder %s113, %s115
      %p122 = scmp.eq.s32.totalorder %s21, 1
      %p123 = por %p121, %p122
      %p124 = scmp.ne.s32.totalorder %s115, %s116
      %p125 = scmp.eq.s32.totalorder %s21, 0
      %p126 = por %p124, %p125
      %p127 = scmp.ne.s32.totalorder %s115, %s116
      %p128 = scmp.eq.s32.totalorder %s22, 1
      %p129 = por %p127, %p128
      %p131 = scmp.ne.s32.totalorder %s116, %s130
      %p132 = scmp.eq.s32.totalorder %s22, 0
      %p133 = por %p131, %p132
      %s134 = ssub.s32 %s16, %s23
      %p135 = scmp.eq.s32.totalorder %s134, 0
      %s137 = sadd.s32 %s136, 1
      %s138 = scalar_select %p135, %s136, %s137
      %p141 = pneg %p135
      %p142 = scmp.eq.s32.totalorder %s16, 1
      %p143 = por %p141, %p142
      %p144 = scmp.ne.s32.totalorder %s136, %s139
      %p145 = scmp.eq.s32.totalorder %s16, 0
      %p146 = por %p144, %p145
      %p147 = scmp.ne.s32.totalorder %s136, %s139
      %p148 = scmp.eq.s32.totalorder %s21, 1
      %p149 = por %p147, %p148
      %p150 = scmp.ne.s32.totalorder %s139, %s140
      %p151 = scmp.eq.s32.totalorder %s21, 0
      %p152 = por %p150, %p151
      %p153 = scmp.ne.s32.totalorder %s139, %s140
      %p154 = scmp.eq.s32.totalorder %s22, 1
      %p155 = por %p153, %p154
      %p157 = scmp.ne.s32.totalorder %s140, %s156
      %p158 = scmp.eq.s32.totalorder %s22, 0
      %p159 = por %p157, %p158
      %p160 = scmp.le.s32.totalorder 1, %s16
      %p161 = scmp.lt.s32.totalorder %s16, 3
      %p162 = pnand %p160, %p161
      %p163 = pneg %p162
      // Predicated region
      $region9: #{tpu_custom_call.1} parent=5 // pred_check
        _
      $region10: #{tpu_custom_call.1} parent=5 // pred_check_branch
        %165 = sbr.rel (%p162) target = $region12
      $region11: #{tpu_custom_call.1} parent=5 // pred_region
        %s166 = ssub.s32 %s16, 1
        // Predicated region
        $region13: #{tpu_custom_call.1} parent=11 // pred_check
          %p167 = pneg %p63
        $region14: #{tpu_custom_call.1} parent=11 // pred_check_branch
          %169 = sbr.rel (%p167) target = $region16
        $region15: #{tpu_custom_call.1} parent=11 // pred_region
          %171 = vsyncadd [#allocation3], 0
          %s172 = sshll.u32 %s1, 4
          %s173 = int_to_ptr.hbm [resolvable:$true] %s172
          %s174 = sshll.u32 [#allocation2], 4
          %s175 = int_to_ptr.vmem [resolvable:$true] %s174
          %180 = dma.hbm_to_vmem [thread:$0]  %s173, 256, %s175, [#allocation3], 64, 64, 4
        $region16: #{tpu_custom_call.1} parent=11 // pred_fallthru
          _
        // Predicated region
        $region17: #{tpu_custom_call.1} parent=11 // pred_check
          %p181 = pneg %p84
        $region18: #{tpu_custom_call.1} parent=11 // pred_check_branch
          %183 = sbr.rel (%p181) target = $region20
        $region19: #{tpu_custom_call.1} parent=11 // pred_region
          _
        $region20: #{tpu_custom_call.1} parent=11 // pred_fallthru
          _
        // Predicated region
        $region21: #{tpu_custom_call.1} parent=11 // pred_check
          %p184 = pneg %p105
        $region22: #{tpu_custom_call.1} parent=11 // pred_check_branch
          %186 = sbr.rel (%p184) target = $region24
        $region23: #{tpu_custom_call.1} parent=11 // pred_region
          _
        $region24: #{tpu_custom_call.1} parent=11 // pred_fallthru
          _
        // Predicated region
        $region25: #{tpu_custom_call.1} parent=11 // pred_check
          %p187 = pneg %p126
        $region26: #{tpu_custom_call.1} parent=11 // pred_check_branch
          %189 = sbr.rel (%p187) target = $region28
        $region27: #{tpu_custom_call.1} parent=11 // pred_region
          %191 = vsyncadd [#allocation6], 0
          %s193 = sshll.u32 %s4, 4
          %s194 = int_to_ptr.hbm [resolvable:$true] %s193
          %s195 = sshll.u32 [#allocation5], 4
          %s196 = int_to_ptr.vmem [resolvable:$true] %s195
          %198 = dma.hbm_to_vmem [thread:$0]  %s194, 128, %s196, [#allocation6]
        $region28: #{tpu_custom_call.1} parent=11 // pred_fallthru
          _
      $region12: #{tpu_custom_call.1} parent=5 // pred_fallthru
        _
      %p199 = scmp.lt.s32.totalorder %s16, 2
      // Predicated region
      $region29: #{tpu_custom_call.1} parent=5 // pred_check
        %p200 = pneg %p199
      $region30: #{tpu_custom_call.1} parent=5 // pred_check_branch
        %202 = sbr.rel (%p200) target = $region32
      $region31: #{tpu_custom_call.1} parent=5 // pred_region
        // Predicated region
        $region33: #{tpu_custom_call.1} parent=31 // pred_check
          %p203 = pneg %p36
        $region34: #{tpu_custom_call.1} parent=31 // pred_check_branch
          %205 = sbr.rel (%p203) target = $region36
        $region35: #{tpu_custom_call.1} parent=31 // pred_region
          %s206 = smul.u32 16, %s16
          %p207 = scmp.lt.s32.totalorder %s206, 31
          %s208 = scalar_select %p207, %s206, 31
          %s209 = smul.addr %s208, 8
          %s210 = scalar_lea.vmem %s0, %s209
          %s211 = smul.u32 16, %s16
        $region36: #{tpu_custom_call.1} parent=31 // pred_fallthru
          _
      $region32: #{tpu_custom_call.1} parent=5 // pred_fallthru
        _
      %p212 = scmp.le.s32.totalorder 1, %s16
      %p213 = scmp.lt.s32.totalorder %s16, 3
      %p214 = pnand %p212, %p213
      %p215 = pneg %p214
      // Predicated region
      $region37: #{tpu_custom_call.1} parent=5 // pred_check
        _
      $region38: #{tpu_custom_call.1} parent=5 // pred_check_branch
        %217 = sbr.rel (%p214) target = $region40
      $region39: #{tpu_custom_call.1} parent=5 // pred_region
        %s218 = ssub.s32 %s16, 1
        // Predicated region
        $region41: #{tpu_custom_call.1} parent=39 // pred_check
          %p219 = pneg %p63
        $region42: #{tpu_custom_call.1} parent=39 // pred_check_branch
          %221 = sbr.rel (%p219) target = $region44
        $region43: #{tpu_custom_call.1} parent=39 // pred_region
          %223 = dma.done [#allocation3], 256
        $region44: #{tpu_custom_call.1} parent=39 // pred_fallthru
          _
        // Predicated region
        $region45: #{tpu_custom_call.1} parent=39 // pred_check
          %p224 = pneg %p126
        $region46: #{tpu_custom_call.1} parent=39 // pred_check_branch
          %226 = sbr.rel (%p224) target = $region48
        $region47: #{tpu_custom_call.1} parent=39 // pred_region
          %228 = dma.done [#allocation6], 128
        $region48: #{tpu_custom_call.1} parent=39 // pred_fallthru
          _
        %s229 = smul.u32 16, %s21
        %p230 = scmp.lt.s32.totalorder %s229, 31
        %s231 = scalar_select %p230, %s229, 31
        %s232 = smul.addr %s231, 8
        %s233 = scalar_lea.vmem %s0, %s232
        %p234 = pneg %p42
        %p235 = pneg %p39
        %p236 = pneg %p63
        %p237 = pneg %p60
        %p238 = pneg %p84
        %p239 = pneg %p81
        %p240 = pneg %p105
        %p241 = pneg %p102
        %p242 = pneg %p126
        %p243 = pneg %p123
        %p244 = pneg %p152
        %p245 = pneg %p149
        %s246 = sand.u32 %s139, 1
        %s247 = scalar_lea.sflag [#allocation4], %s246
        %s248 = sand.u32 %s139, 1
        %s249 = smul.addr %s248, 128
        %s250 = scalar_lea.vmem [#allocation7], %s249
        %s251 = smul.u32 16, %s21
        %p252 = scmp.lt.s32.totalorder %s251, 31
        %s253 = scalar_select %p252, %s251, 31
        %s254 = smul.addr %s253, 8
        %s255 = scalar_lea.vmem %s0, %s254
        %s256 = smul.u32 16, %s21
        %s257 = smul.u32 16, %s21
        %v259 = vld [vmem:[%s255] sm:$0xff]
        %v260 = vld [vmem:[%s255 + $0x8] sm:$0xff]
        %v261 = vld [vmem:[%s255 + $0x10] sm:$0xff]
        %v262 = vld [vmem:[%s255 + $0x18] sm:$0xff]
        %v263 = vld [vmem:[%s255 + $0x20] sm:$0xff]
        %v264 = vld [vmem:[%s255 + $0x28] sm:$0xff]
        %v265 = vld [vmem:[%s255 + $0x30] sm:$0xff]
        %v266 = vld [vmem:[%s255 + $0x38] sm:$0xff]
        %v267 = vld [vmem:[%s255 + $0x40] sm:$0xff]
        %v268 = vld [vmem:[%s255 + $0x48] sm:$0xff]
        %v269 = vld [vmem:[%s255 + $0x50] sm:$0xff]
        %v270 = vld [vmem:[%s255 + $0x58] sm:$0xff]
        %v271 = vld [vmem:[%s255 + $0x60] sm:$0xff]
        %v272 = vld [vmem:[%s255 + $0x68] sm:$0xff]
        %v273 = vld [vmem:[%s255 + $0x70] sm:$0xff]
        %v274 = vld [vmem:[%s255 + $0x78] sm:$0xff]
        %v275 = vpack.c.bf16 %v260, %v259
        %v276 = vpack.c.bf16 %v262, %v261
        %v277 = vpack.c.bf16 %v264, %v263
        %v278 = vpack.c.bf16 %v266, %v265
        %v279 = vpack.c.bf16 %v268, %v267
        %v280 = vpack.c.bf16 %v270, %v269
        %v281 = vpack.c.bf16 %v272, %v271
        %v282 = vpack.c.bf16 %v274, %v273
        %v283 = vld [vmem:[#allocation2] sm:$0xf]
        %v284 = vld [vmem:[#allocation2 + $0x4] sm:$0xf]
        %v285 = vld [vmem:[#allocation2 + $0x8] sm:$0xf]
        %v286 = vld [vmem:[#allocation2 + $0xc] sm:$0xf]
        %v287 = vld [vmem:[#allocation5] sm:$0x1]
        %v288 = vperm.slane %v287, 0
        %v293 = vunpack.c.l.b16 %v283
        %v294 = vunpack.c.l.b16 %v284
        %v295 = vunpack.c.l.b16 %v285
        %v296 = vunpack.c.l.b16 %v286
        %v297 = vpack.c.b16 %v294, %v293
        %v298 = vpack.c.b16 %v296, %v295
        %vm301 = vcmask 261120
        %v303 = vsel %vm301, %v275, 0
        %v306 = vsel %vm301, %v276, 0
        %v309 = vsel %vm301, %v277, 0
        %v312 = vsel %vm301, %v278, 0
        %v315 = vsel %vm301, %v279, 0
        %v318 = vsel %vm301, %v280, 0
        %v321 = vsel %vm301, %v281, 0
        %v324 = vsel %vm301, %v282, 0
        %326 = vmatpush.bf16.msra.mxu0 0
        %327 = vmatpush.bf16.msra.mxu0 0
        %328 = vmatpush.bf16.msra.mxu0 0
        %329 = vmatpush.bf16.msra.mxu0 0
        %330 = vmatpush.bf16.msra.mxu0 0
        %331 = vmatpush.bf16.msra.mxu0 0
        %332 = vmatpush.bf16.msra.mxu0 %v298
        %333 = vmatpush.bf16.msra.mxu0 %v297
        %334 = vmatmul.bf16.gmra.mxu0 %v303
        %v335 = vpop.f32.mrf.mxu0
        %v336 = vadd.f32 %v288, %v335
        %v337 = vpop.f32.mrf.mxu0
        %v338 = vadd.f32 %v288, %v337
        %339 = vmatmul.bf16.gmra.mxu0 %v306
        %v340 = vpop.f32.mrf.mxu0
        %v341 = vadd.f32 %v288, %v340
        %v342 = vpop.f32.mrf.mxu0
        %v343 = vadd.f32 %v288, %v342
        %344 = vmatmul.bf16.gmra.mxu0 %v309
        %v345 = vpop.f32.mrf.mxu0
        %v346 = vadd.f32 %v288, %v345
        %v347 = vpop.f32.mrf.mxu0
        %v348 = vadd.f32 %v288, %v347
        %349 = vmatmul.bf16.gmra.mxu0 %v312
        %v350 = vpop.f32.mrf.mxu0
        %v351 = vadd.f32 %v288, %v350
        %v352 = vpop.f32.mrf.mxu0
        %v353 = vadd.f32 %v288, %v352
        %354 = vmatmul.bf16.gmra.mxu0 %v315
        %v355 = vpop.f32.mrf.mxu0
        %v356 = vadd.f32 %v288, %v355
        %v357 = vpop.f32.mrf.mxu0
        %v358 = vadd.f32 %v288, %v357
        %359 = vmatmul.bf16.gmra.mxu0 %v318
        %v360 = vpop.f32.mrf.mxu0
        %v361 = vadd.f32 %v288, %v360
        %v362 = vpop.f32.mrf.mxu0
        %v363 = vadd.f32 %v288, %v362
        %364 = vmatmul.bf16.gmra.mxu0 %v321
        %v365 = vpop.f32.mrf.mxu0
        %v366 = vadd.f32 %v288, %v365
        %v367 = vpop.f32.mrf.mxu0
        %v368 = vadd.f32 %v288, %v367
        %369 = vmatmul.bf16.gmra.mxu0 %v324
        %v370 = vpop.f32.mrf.mxu0
        %v371 = vadd.f32 %v288, %v370
        %v372 = vpop.f32.mrf.mxu0
        %v373 = vadd.f32 %v288, %v372
        %374 = vdwg.mxu0
        %v375 = vmax.f32 %v336, 0.0
        %v376 = vmax.f32 %v338, 0.0
        %v377 = vmax.f32 %v341, 0.0
        %v378 = vmax.f32 %v343, 0.0
        %v379 = vmax.f32 %v346, 0.0
        %v380 = vmax.f32 %v348, 0.0
        %v381 = vmax.f32 %v351, 0.0
        %v382 = vmax.f32 %v353, 0.0
        %v383 = vmax.f32 %v356, 0.0
        %v384 = vmax.f32 %v358, 0.0
        %v385 = vmax.f32 %v361, 0.0
        %v386 = vmax.f32 %v363, 0.0
        %v387 = vmax.f32 %v366, 0.0
        %v388 = vmax.f32 %v368, 0.0
        %v389 = vmax.f32 %v371, 0.0
        %v390 = vmax.f32 %v373, 0.0
        %v391 = vpack.c.bf16 %v375, %v375
        %v392 = vpack.c.bf16 %v376, %v376
        %v393 = vpack.c.bf16 %v377, %v377
        %v394 = vpack.c.bf16 %v378, %v378
        %v395 = vpack.c.bf16 %v379, %v379
        %v396 = vpack.c.bf16 %v380, %v380
        %v397 = vpack.c.bf16 %v381, %v381
        %v398 = vpack.c.bf16 %v382, %v382
        %v399 = vpack.c.bf16 %v383, %v383
        %v400 = vpack.c.bf16 %v384, %v384
        %v401 = vpack.c.bf16 %v385, %v385
        %v402 = vpack.c.bf16 %v386, %v386
        %v403 = vpack.c.bf16 %v387, %v387
        %v404 = vpack.c.bf16 %v388, %v388
        %v405 = vpack.c.bf16 %v389, %v389
        %v406 = vpack.c.bf16 %v390, %v390
        %v407 = vld [vmem:[%s2] sm:$0xf]
        %v408 = vld [vmem:[%s2 + $0x4] sm:$0xf]
        %v409 = vld [vmem:[%s2 + $0x8] sm:$0xf]
        %v410 = vld [vmem:[%s2 + $0xc] sm:$0xf]
        %v411 = vld [vmem:[%s2 + $0x10] sm:$0xf]
        %v412 = vld [vmem:[%s2 + $0x14] sm:$0xf]
        %v413 = vld [vmem:[%s2 + $0x18] sm:$0xf]
        %v414 = vld [vmem:[%s2 + $0x1c] sm:$0xf]
        %v415 = vld [vmem:[%s2 + $0x20] sm:$0xf]
        %v416 = vld [vmem:[%s2 + $0x24] sm:$0xf]
        %v417 = vld [vmem:[%s2 + $0x28] sm:$0xf]
        %v418 = vld [vmem:[%s2 + $0x2c] sm:$0xf]
        %v419 = vld [vmem:[%s2 + $0x30] sm:$0xf]
        %v420 = vld [vmem:[%s2 + $0x34] sm:$0xf]
        %v421 = vld [vmem:[%s2 + $0x38] sm:$0xf]
        %v422 = vld [vmem:[%s2 + $0x3c] sm:$0xf]
        %v423 = vld [vmem:[#allocation5 + $0x1] sm:$0x1]
        %v424 = vperm.slane %v423, 0
        %v441 = vunpack.c.l.b16 %v391
        %v442 = vunpack.c.l.b16 %v392
        %v443 = vunpack.c.l.b16 %v393
        %v444 = vunpack.c.l.b16 %v394
        %v445 = vunpack.c.l.b16 %v395
        %v446 = vunpack.c.l.b16 %v396
        %v447 = vunpack.c.l.b16 %v397
        %v448 = vunpack.c.l.b16 %v398
        %v449 = vunpack.c.l.b16 %v399
        %v450 = vunpack.c.l.b16 %v400
        %v451 = vunpack.c.l.b16 %v401
        %v452 = vunpack.c.l.b16 %v402
        %v453 = vunpack.c.l.b16 %v403
        %v454 = vunpack.c.l.b16 %v404
        %v455 = vunpack.c.l.b16 %v405
        %v456 = vunpack.c.l.b16 %v406
        %v457 = vpack.c.b16 %v442, %v441
        %v458 = vpack.c.b16 %v444, %v443
        %v459 = vpack.c.b16 %v446, %v445
        %v460 = vpack.c.b16 %v448, %v447
        %v461 = vpack.c.b16 %v450, %v449
        %v462 = vpack.c.b16 %v452, %v451
        %v463 = vpack.c.b16 %v454, %v453
        %v464 = vpack.c.b16 %v456, %v455
        %v489 = vunpack.c.l.b16 %v407
        %v490 = vunpack.c.l.b16 %v408
        %v491 = vunpack.c.l.b16 %v409
        %v492 = vunpack.c.l.b16 %v410
        %v493 = vunpack.c.l.b16 %v411
        %v494 = vunpack.c.l.b16 %v412
        %v495 = vunpack.c.l.b16 %v413
        %v496 = vunpack.c.l.b16 %v414
        %v497 = vunpack.c.l.b16 %v415
        %v498 = vunpack.c.l.b16 %v416
        %v499 = vunpack.c.l.b16 %v417
        %v500 = vunpack.c.l.b16 %v418
        %v501 = vunpack.c.l.b16 %v419
        %v502 = vunpack.c.l.b16 %v420
        %v503 = vunpack.c.l.b16 %v421
        %v504 = vunpack.c.l.b16 %v422
        %v505 = vpack.c.b16 %v490, %v489
        %v506 = vpack.c.b16 %v492, %v491
        %v507 = vpack.c.b16 %v494, %v493
        %v508 = vpack.c.b16 %v496, %v495
        %v509 = vpack.c.b16 %v498, %v497
        %v510 = vpack.c.b16 %v500, %v499
        %v511 = vpack.c.b16 %v502, %v501
        %v512 = vpack.c.b16 %v504, %v503
        %521 = vmatpush.bf16.msra.mxu0 %v512
        %522 = vmatpush.bf16.msra.mxu0 %v511
        %523 = vmatpush.bf16.msra.mxu0 %v510
        %524 = vmatpush.bf16.msra.mxu0 %v509
        %525 = vmatpush.bf16.msra.mxu0 %v508
        %526 = vmatpush.bf16.msra.mxu0 %v507
        %527 = vmatpush.bf16.msra.mxu0 %v506
        %528 = vmatpush.bf16.msra.mxu0 %v505
        %529 = vmatmul.bf16.gmra.mxu0 %v457
        %v530 = vpop.f32.mrf.mxu0
        %v531 = vadd.f32 %v424, %v530
        %v532 = vpop.f32.mrf.mxu0
        %v533 = vadd.f32 %v424, %v532
        %534 = vmatmul.bf16.gmra.mxu0 %v458
        %v535 = vpop.f32.mrf.mxu0
        %v536 = vadd.f32 %v424, %v535
        %v537 = vpop.f32.mrf.mxu0
        %v538 = vadd.f32 %v424, %v537
        %539 = vmatmul.bf16.gmra.mxu0 %v459
        %v540 = vpop.f32.mrf.mxu0
        %v541 = vadd.f32 %v424, %v540
        %v542 = vpop.f32.mrf.mxu0
        %v543 = vadd.f32 %v424, %v542
        %544 = vmatmul.bf16.gmra.mxu0 %v460
        %v545 = vpop.f32.mrf.mxu0
        %v546 = vadd.f32 %v424, %v545
        %v547 = vpop.f32.mrf.mxu0
        %v548 = vadd.f32 %v424, %v547
        %549 = vmatmul.bf16.gmra.mxu0 %v461
        %v550 = vpop.f32.mrf.mxu0
        %v551 = vadd.f32 %v424, %v550
        %v552 = vpop.f32.mrf.mxu0
        %v553 = vadd.f32 %v424, %v552
        %554 = vmatmul.bf16.gmra.mxu0 %v462
        %v555 = vpop.f32.mrf.mxu0
        %v556 = vadd.f32 %v424, %v555
        %v557 = vpop.f32.mrf.mxu0
        %v558 = vadd.f32 %v424, %v557
        %559 = vmatmul.bf16.gmra.mxu0 %v463
        %v560 = vpop.f32.mrf.mxu0
        %v561 = vadd.f32 %v424, %v560
        %v562 = vpop.f32.mrf.mxu0
        %v563 = vadd.f32 %v424, %v562
        %564 = vmatmul.bf16.gmra.mxu0 %v464
        %v565 = vpop.f32.mrf.mxu0
        %v566 = vadd.f32 %v424, %v565
        %v567 = vpop.f32.mrf.mxu0
        %v568 = vadd.f32 %v424, %v567
        %569 = vdwg.mxu0
        %v570 = vmax.f32 %v531, 0.0
        %v571 = vmax.f32 %v533, 0.0
        %v572 = vmax.f32 %v536, 0.0
        %v573 = vmax.f32 %v538, 0.0
        %v574 = vmax.f32 %v541, 0.0
        %v575 = vmax.f32 %v543, 0.0
        %v576 = vmax.f32 %v546, 0.0
        %v577 = vmax.f32 %v548, 0.0
        %v578 = vmax.f32 %v551, 0.0
        %v579 = vmax.f32 %v553, 0.0
        %v580 = vmax.f32 %v556, 0.0
        %v581 = vmax.f32 %v558, 0.0
        %v582 = vmax.f32 %v561, 0.0
        %v583 = vmax.f32 %v563, 0.0
        %v584 = vmax.f32 %v566, 0.0
        %v585 = vmax.f32 %v568, 0.0
        %v586 = vpack.c.bf16 %v571, %v570
        %v587 = vpack.c.bf16 %v573, %v572
        %v588 = vpack.c.bf16 %v575, %v574
        %v589 = vpack.c.bf16 %v577, %v576
        %v590 = vpack.c.bf16 %v579, %v578
        %v591 = vpack.c.bf16 %v581, %v580
        %v592 = vpack.c.bf16 %v583, %v582
        %v593 = vpack.c.bf16 %v585, %v584
        %s594 = scalar_lea.vmem %s2, 64
        %v595 = vld [vmem:[%s594] sm:$0xf]
        %v596 = vld [vmem:[%s594 + $0x4] sm:$0xf]
        %v597 = vld [vmem:[%s594 + $0x8] sm:$0xf]
        %v598 = vld [vmem:[%s594 + $0xc] sm:$0xf]
        %v599 = vld [vmem:[%s594 + $0x10] sm:$0xf]
        %v600 = vld [vmem:[%s594 + $0x14] sm:$0xf]
        %v601 = vld [vmem:[%s594 + $0x18] sm:$0xf]
        %v602 = vld [vmem:[%s594 + $0x1c] sm:$0xf]
        %v603 = vld [vmem:[%s594 + $0x20] sm:$0xf]
        %v604 = vld [vmem:[%s594 + $0x24] sm:$0xf]
        %v605 = vld [vmem:[%s594 + $0x28] sm:$0xf]
        %v606 = vld [vmem:[%s594 + $0x2c] sm:$0xf]
        %v607 = vld [vmem:[%s594 + $0x30] sm:$0xf]
        %v608 = vld [vmem:[%s594 + $0x34] sm:$0xf]
        %v609 = vld [vmem:[%s594 + $0x38] sm:$0xf]
        %v610 = vld [vmem:[%s594 + $0x3c] sm:$0xf]
        %v611 = vld [vmem:[#allocation5 + $0x2] sm:$0x1]
        %v612 = vperm.slane %v611, 0
        %v629 = vunpack.c.l.b16 %v595
        %v630 = vunpack.c.l.b16 %v596
        %v631 = vunpack.c.l.b16 %v597
        %v632 = vunpack.c.l.b16 %v598
        %v633 = vunpack.c.l.b16 %v599
        %v634 = vunpack.c.l.b16 %v600
        %v635 = vunpack.c.l.b16 %v601
        %v636 = vunpack.c.l.b16 %v602
        %v637 = vunpack.c.l.b16 %v603
        %v638 = vunpack.c.l.b16 %v604
        %v639 = vunpack.c.l.b16 %v605
        %v640 = vunpack.c.l.b16 %v606
        %v641 = vunpack.c.l.b16 %v607
        %v642 = vunpack.c.l.b16 %v608
        %v643 = vunpack.c.l.b16 %v609
        %v644 = vunpack.c.l.b16 %v610
        %v645 = vpack.c.b16 %v630, %v629
        %v646 = vpack.c.b16 %v632, %v631
        %v647 = vpack.c.b16 %v634, %v633
        %v648 = vpack.c.b16 %v636, %v635
        %v649 = vpack.c.b16 %v638, %v637
        %v650 = vpack.c.b16 %v640, %v639
        %v651 = vpack.c.b16 %v642, %v641
        %v652 = vpack.c.b16 %v644, %v643
        %661 = vmatpush.bf16.msra.mxu0 %v652
        %662 = vmatpush.bf16.msra.mxu0 %v651
        %663 = vmatpush.bf16.msra.mxu0 %v650
        %664 = vmatpush.bf16.msra.mxu0 %v649
        %665 = vmatpush.bf16.msra.mxu0 %v648
        %666 = vmatpush.bf16.msra.mxu0 %v647
        %667 = vmatpush.bf16.msra.mxu0 %v646
        %668 = vmatpush.bf16.msra.mxu0 %v645
        %669 = vmatmul.bf16.gmra.mxu0 %v586
        %v670 = vpop.f32.mrf.mxu0
        %v671 = vadd.f32 %v612, %v670
        %v672 = vpop.f32.mrf.mxu0
        %v673 = vadd.f32 %v612, %v672
        %674 = vmatmul.bf16.gmra.mxu0 %v587
        %v675 = vpop.f32.mrf.mxu0
        %v676 = vadd.f32 %v612, %v675
        %v677 = vpop.f32.mrf.mxu0
        %v678 = vadd.f32 %v612, %v677
        %679 = vmatmul.bf16.gmra.mxu0 %v588
        %v680 = vpop.f32.mrf.mxu0
        %v681 = vadd.f32 %v612, %v680
        %v682 = vpop.f32.mrf.mxu0
        %v683 = vadd.f32 %v612, %v682
        %684 = vmatmul.bf16.gmra.mxu0 %v589
        %v685 = vpop.f32.mrf.mxu0
        %v686 = vadd.f32 %v612, %v685
        %v687 = vpop.f32.mrf.mxu0
        %v688 = vadd.f32 %v612, %v687
        %689 = vmatmul.bf16.gmra.mxu0 %v590
        %v690 = vpop.f32.mrf.mxu0
        %v691 = vadd.f32 %v612, %v690
        %v692 = vpop.f32.mrf.mxu0
        %v693 = vadd.f32 %v612, %v692
        %694 = vmatmul.bf16.gmra.mxu0 %v591
        %v695 = vpop.f32.mrf.mxu0
        %v696 = vadd.f32 %v612, %v695
        %v697 = vpop.f32.mrf.mxu0
        %v698 = vadd.f32 %v612, %v697
        %699 = vmatmul.bf16.gmra.mxu0 %v592
        %v700 = vpop.f32.mrf.mxu0
        %v701 = vadd.f32 %v612, %v700
        %v702 = vpop.f32.mrf.mxu0
        %v703 = vadd.f32 %v612, %v702
        %704 = vmatmul.bf16.gmra.mxu0 %v593
        %v705 = vpop.f32.mrf.mxu0
        %v706 = vadd.f32 %v612, %v705
        %v707 = vpop.f32.mrf.mxu0
        %v708 = vadd.f32 %v612, %v707
        %709 = vdwg.mxu0
        %v710 = vmax.f32 %v671, 0.0
        %v711 = vmax.f32 %v673, 0.0
        %v712 = vmax.f32 %v676, 0.0
        %v713 = vmax.f32 %v678, 0.0
        %v714 = vmax.f32 %v681, 0.0
        %v715 = vmax.f32 %v683, 0.0
        %v716 = vmax.f32 %v686, 0.0
        %v717 = vmax.f32 %v688, 0.0
        %v718 = vmax.f32 %v691, 0.0
        %v719 = vmax.f32 %v693, 0.0
        %v720 = vmax.f32 %v696, 0.0
        %v721 = vmax.f32 %v698, 0.0
        %v722 = vmax.f32 %v701, 0.0
        %v723 = vmax.f32 %v703, 0.0
        %v724 = vmax.f32 %v706, 0.0
        %v725 = vmax.f32 %v708, 0.0
        %v726 = vpack.c.bf16 %v710, %v710
        %v727 = vpack.c.bf16 %v711, %v711
        %v728 = vpack.c.bf16 %v712, %v712
        %v729 = vpack.c.bf16 %v713, %v713
        %v730 = vpack.c.bf16 %v714, %v714
        %v731 = vpack.c.bf16 %v715, %v715
        %v732 = vpack.c.bf16 %v716, %v716
        %v733 = vpack.c.bf16 %v717, %v717
        %v734 = vpack.c.bf16 %v718, %v718
        %v735 = vpack.c.bf16 %v719, %v719
        %v736 = vpack.c.bf16 %v720, %v720
        %v737 = vpack.c.bf16 %v721, %v721
        %v738 = vpack.c.bf16 %v722, %v722
        %v739 = vpack.c.bf16 %v723, %v723
        %v740 = vpack.c.bf16 %v724, %v724
        %v741 = vpack.c.bf16 %v725, %v725
        %v742 = vunpack.c.l.bf16 %v391
        %v743 = vunpack.c.l.bf16 %v392
        %v744 = vunpack.c.l.bf16 %v393
        %v745 = vunpack.c.l.bf16 %v394
        %v746 = vunpack.c.l.bf16 %v395
        %v747 = vunpack.c.l.bf16 %v396
        %v748 = vunpack.c.l.bf16 %v397
        %v749 = vunpack.c.l.bf16 %v398
        %v750 = vunpack.c.l.bf16 %v399
        %v751 = vunpack.c.l.bf16 %v400
        %v752 = vunpack.c.l.bf16 %v401
        %v753 = vunpack.c.l.bf16 %v402
        %v754 = vunpack.c.l.bf16 %v403
        %v755 = vunpack.c.l.bf16 %v404
        %v756 = vunpack.c.l.bf16 %v405
        %v757 = vunpack.c.l.bf16 %v406
        %v758 = vunpack.c.l.bf16 %v726
        %v759 = vunpack.c.l.bf16 %v727
        %v760 = vunpack.c.l.bf16 %v728
        %v761 = vunpack.c.l.bf16 %v729
        %v762 = vunpack.c.l.bf16 %v730
        %v763 = vunpack.c.l.bf16 %v731
        %v764 = vunpack.c.l.bf16 %v732
        %v765 = vunpack.c.l.bf16 %v733
        %v766 = vunpack.c.l.bf16 %v734
        %v767 = vunpack.c.l.bf16 %v735
        %v768 = vunpack.c.l.bf16 %v736
        %v769 = vunpack.c.l.bf16 %v737
        %v770 = vunpack.c.l.bf16 %v738
        %v771 = vunpack.c.l.bf16 %v739
        %v772 = vunpack.c.l.bf16 %v740
        %v773 = vunpack.c.l.bf16 %v741
        %v774 = vadd.f32 %v742, %v758
        %v775 = vadd.f32 %v743, %v759
        %v776 = vadd.f32 %v744, %v760
        %v777 = vadd.f32 %v745, %v761
        %v778 = vadd.f32 %v746, %v762
        %v779 = vadd.f32 %v747, %v763
        %v780 = vadd.f32 %v748, %v764
        %v781 = vadd.f32 %v749, %v765
        %v782 = vadd.f32 %v750, %v766
        %v783 = vadd.f32 %v751, %v767
        %v784 = vadd.f32 %v752, %v768
        %v785 = vadd.f32 %v753, %v769
        %v786 = vadd.f32 %v754, %v770
        %v787 = vadd.f32 %v755, %v771
        %v788 = vadd.f32 %v756, %v772
        %v789 = vadd.f32 %v757, %v773
        %v790 = vpack.c.bf16 %v774, %v774
        %v791 = vpack.c.bf16 %v775, %v775
        %v792 = vpack.c.bf16 %v776, %v776
        %v793 = vpack.c.bf16 %v777, %v777
        %v794 = vpack.c.bf16 %v778, %v778
        %v795 = vpack.c.bf16 %v779, %v779
        %v796 = vpack.c.bf16 %v780, %v780
        %v797 = vpack.c.bf16 %v781, %v781
        %v798 = vpack.c.bf16 %v782, %v782
        %v799 = vpack.c.bf16 %v783, %v783
        %v800 = vpack.c.bf16 %v784, %v784
        %v801 = vpack.c.bf16 %v785, %v785
        %v802 = vpack.c.bf16 %v786, %v786
        %v803 = vpack.c.bf16 %v787, %v787
        %v804 = vpack.c.bf16 %v788, %v788
        %v805 = vpack.c.bf16 %v789, %v789
        %s806 = scalar_lea.vmem %s2, 128
        %v807 = vld [vmem:[%s806] sm:$0xf]
        %v808 = vld [vmem:[%s806 + $0x4] sm:$0xf]
        %v809 = vld [vmem:[%s806 + $0x8] sm:$0xf]
        %v810 = vld [vmem:[%s806 + $0xc] sm:$0xf]
        %v811 = vld [vmem:[%s806 + $0x10] sm:$0xf]
        %v812 = vld [vmem:[%s806 + $0x14] sm:$0xf]
        %v813 = vld [vmem:[%s806 + $0x18] sm:$0xf]
        %v814 = vld [vmem:[%s806 + $0x1c] sm:$0xf]
        %v815 = vld [vmem:[%s806 + $0x20] sm:$0xf]
        %v816 = vld [vmem:[%s806 + $0x24] sm:$0xf]
        %v817 = vld [vmem:[%s806 + $0x28] sm:$0xf]
        %v818 = vld [vmem:[%s806 + $0x2c] sm:$0xf]
        %v819 = vld [vmem:[%s806 + $0x30] sm:$0xf]
        %v820 = vld [vmem:[%s806 + $0x34] sm:$0xf]
        %v821 = vld [vmem:[%s806 + $0x38] sm:$0xf]
        %v822 = vld [vmem:[%s806 + $0x3c] sm:$0xf]
        %v823 = vld [vmem:[#allocation5 + $0x3] sm:$0x1]
        %v824 = vperm.slane %v823, 0
        %v841 = vunpack.c.l.b16 %v790
        %v842 = vunpack.c.l.b16 %v791
        %v843 = vunpack.c.l.b16 %v792
        %v844 = vunpack.c.l.b16 %v793
        %v845 = vunpack.c.l.b16 %v794
        %v846 = vunpack.c.l.b16 %v795
        %v847 = vunpack.c.l.b16 %v796
        %v848 = vunpack.c.l.b16 %v797
        %v849 = vunpack.c.l.b16 %v798
        %v850 = vunpack.c.l.b16 %v799
        %v851 = vunpack.c.l.b16 %v800
        %v852 = vunpack.c.l.b16 %v801
        %v853 = vunpack.c.l.b16 %v802
        %v854 = vunpack.c.l.b16 %v803
        %v855 = vunpack.c.l.b16 %v804
        %v856 = vunpack.c.l.b16 %v805
        %v857 = vpack.c.b16 %v842, %v841
        %v858 = vpack.c.b16 %v844, %v843
        %v859 = vpack.c.b16 %v846, %v845
        %v860 = vpack.c.b16 %v848, %v847
        %v861 = vpack.c.b16 %v850, %v849
        %v862 = vpack.c.b16 %v852, %v851
        %v863 = vpack.c.b16 %v854, %v853
        %v864 = vpack.c.b16 %v856, %v855
        %v889 = vunpack.c.l.b16 %v807
        %v890 = vunpack.c.l.b16 %v808
        %v891 = vunpack.c.l.b16 %v809
        %v892 = vunpack.c.l.b16 %v810
        %v893 = vunpack.c.l.b16 %v811
        %v894 = vunpack.c.l.b16 %v812
        %v895 = vunpack.c.l.b16 %v813
        %v896 = vunpack.c.l.b16 %v814
        %v897 = vunpack.c.l.b16 %v815
        %v898 = vunpack.c.l.b16 %v816
        %v899 = vunpack.c.l.b16 %v817
        %v900 = vunpack.c.l.b16 %v818
        %v901 = vunpack.c.l.b16 %v819
        %v902 = vunpack.c.l.b16 %v820
        %v903 = vunpack.c.l.b16 %v821
        %v904 = vunpack.c.l.b16 %v822
        %v905 = vpack.c.b16 %v890, %v889
        %v906 = vpack.c.b16 %v892, %v891
        %v907 = vpack.c.b16 %v894, %v893
        %v908 = vpack.c.b16 %v896, %v895
        %v909 = vpack.c.b16 %v898, %v897
        %v910 = vpack.c.b16 %v900, %v899
        %v911 = vpack.c.b16 %v902, %v901
        %v912 = vpack.c.b16 %v904, %v903
        %921 = vmatpush.bf16.msra.mxu0 %v912
        %922 = vmatpush.bf16.msra.mxu0 %v911
        %923 = vmatpush.bf16.msra.mxu0 %v910
        %924 = vmatpush.bf16.msra.mxu0 %v909
        %925 = vmatpush.bf16.msra.mxu0 %v908
        %926 = vmatpush.bf16.msra.mxu0 %v907
        %927 = vmatpush.bf16.msra.mxu0 %v906
        %928 = vmatpush.bf16.msra.mxu0 %v905
        %929 = vmatmul.bf16.gmra.mxu0 %v857
        %v930 = vpop.f32.mrf.mxu0
        %v931 = vadd.f32 %v824, %v930
        %v932 = vpop.f32.mrf.mxu0
        %v933 = vadd.f32 %v824, %v932
        %934 = vmatmul.bf16.gmra.mxu0 %v858
        %v935 = vpop.f32.mrf.mxu0
        %v936 = vadd.f32 %v824, %v935
        %v937 = vpop.f32.mrf.mxu0
        %v938 = vadd.f32 %v824, %v937
        %939 = vmatmul.bf16.gmra.mxu0 %v859
        %v940 = vpop.f32.mrf.mxu0
        %v941 = vadd.f32 %v824, %v940
        %v942 = vpop.f32.mrf.mxu0
        %v943 = vadd.f32 %v824, %v942
        %944 = vmatmul.bf16.gmra.mxu0 %v860
        %v945 = vpop.f32.mrf.mxu0
        %v946 = vadd.f32 %v824, %v945
        %v947 = vpop.f32.mrf.mxu0
        %v948 = vadd.f32 %v824, %v947
        %949 = vmatmul.bf16.gmra.mxu0 %v861
        %v950 = vpop.f32.mrf.mxu0
        %v951 = vadd.f32 %v824, %v950
        %v952 = vpop.f32.mrf.mxu0
        %v953 = vadd.f32 %v824, %v952
        %954 = vmatmul.bf16.gmra.mxu0 %v862
        %v955 = vpop.f32.mrf.mxu0
        %v956 = vadd.f32 %v824, %v955
        %v957 = vpop.f32.mrf.mxu0
        %v958 = vadd.f32 %v824, %v957
        %959 = vmatmul.bf16.gmra.mxu0 %v863
        %v960 = vpop.f32.mrf.mxu0
        %v961 = vadd.f32 %v824, %v960
        %v962 = vpop.f32.mrf.mxu0
        %v963 = vadd.f32 %v824, %v962
        %964 = vmatmul.bf16.gmra.mxu0 %v864
        %v965 = vpop.f32.mrf.mxu0
        %v966 = vadd.f32 %v824, %v965
        %v967 = vpop.f32.mrf.mxu0
        %v968 = vadd.f32 %v824, %v967
        %969 = vdwg.mxu0
        %v970 = vmax.f32 %v931, 0.0
        %v971 = vmax.f32 %v933, 0.0
        %v972 = vmax.f32 %v936, 0.0
        %v973 = vmax.f32 %v938, 0.0
        %v974 = vmax.f32 %v941, 0.0
        %v975 = vmax.f32 %v943, 0.0
        %v976 = vmax.f32 %v946, 0.0
        %v977 = vmax.f32 %v948, 0.0
        %v978 = vmax.f32 %v951, 0.0
        %v979 = vmax.f32 %v953, 0.0
        %v980 = vmax.f32 %v956, 0.0
        %v981 = vmax.f32 %v958, 0.0
        %v982 = vmax.f32 %v961, 0.0
        %v983 = vmax.f32 %v963, 0.0
        %v984 = vmax.f32 %v966, 0.0
        %v985 = vmax.f32 %v968, 0.0
        %v986 = vpack.c.bf16 %v971, %v970
        %v987 = vpack.c.bf16 %v973, %v972
        %v988 = vpack.c.bf16 %v975, %v974
        %v989 = vpack.c.bf16 %v977, %v976
        %v990 = vpack.c.bf16 %v979, %v978
        %v991 = vpack.c.bf16 %v981, %v980
        %v992 = vpack.c.bf16 %v983, %v982
        %v993 = vpack.c.bf16 %v985, %v984
        %s994 = scalar_lea.vmem %s2, 192
        %v995 = vld [vmem:[%s994] sm:$0xf]
        %v996 = vld [vmem:[%s994 + $0x4] sm:$0xf]
        %v997 = vld [vmem:[%s994 + $0x8] sm:$0xf]
        %v998 = vld [vmem:[%s994 + $0xc] sm:$0xf]
        %v999 = vld [vmem:[%s994 + $0x10] sm:$0xf]
        %v1000 = vld [vmem:[%s994 + $0x14] sm:$0xf]
        %v1001 = vld [vmem:[%s994 + $0x18] sm:$0xf]
        %v1002 = vld [vmem:[%s994 + $0x1c] sm:$0xf]
        %v1003 = vld [vmem:[%s994 + $0x20] sm:$0xf]
        %v1004 = vld [vmem:[%s994 + $0x24] sm:$0xf]
        %v1005 = vld [vmem:[%s994 + $0x28] sm:$0xf]
        %v1006 = vld [vmem:[%s994 + $0x2c] sm:$0xf]
        %v1007 = vld [vmem:[%s994 + $0x30] sm:$0xf]
        %v1008 = vld [vmem:[%s994 + $0x34] sm:$0xf]
        %v1009 = vld [vmem:[%s994 + $0x38] sm:$0xf]
        %v1010 = vld [vmem:[%s994 + $0x3c] sm:$0xf]
        %v1011 = vld [vmem:[#allocation5 + $0x4] sm:$0x1]
        %v1012 = vperm.slane %v1011, 0
        %v1029 = vunpack.c.l.b16 %v995
        %v1030 = vunpack.c.l.b16 %v996
        %v1031 = vunpack.c.l.b16 %v997
        %v1032 = vunpack.c.l.b16 %v998
        %v1033 = vunpack.c.l.b16 %v999
        %v1034 = vunpack.c.l.b16 %v1000
        %v1035 = vunpack.c.l.b16 %v1001
        %v1036 = vunpack.c.l.b16 %v1002
        %v1037 = vunpack.c.l.b16 %v1003
        %v1038 = vunpack.c.l.b16 %v1004
        %v1039 = vunpack.c.l.b16 %v1005
        %v1040 = vunpack.c.l.b16 %v1006
        %v1041 = vunpack.c.l.b16 %v1007
        %v1042 = vunpack.c.l.b16 %v1008
        %v1043 = vunpack.c.l.b16 %v1009
        %v1044 = vunpack.c.l.b16 %v1010
        %v1045 = vpack.c.b16 %v1030, %v1029
        %v1046 = vpack.c.b16 %v1032, %v1031
        %v1047 = vpack.c.b16 %v1034, %v1033
        %v1048 = vpack.c.b16 %v1036, %v1035
        %v1049 = vpack.c.b16 %v1038, %v1037
        %v1050 = vpack.c.b16 %v1040, %v1039
        %v1051 = vpack.c.b16 %v1042, %v1041
        %v1052 = vpack.c.b16 %v1044, %v1043
        %1061 = vmatpush.bf16.msra.mxu0 %v1052
        %1062 = vmatpush.bf16.msra.mxu0 %v1051
        %1063 = vmatpush.bf16.msra.mxu0 %v1050
        %1064 = vmatpush.bf16.msra.mxu0 %v1049
        %1065 = vmatpush.bf16.msra.mxu0 %v1048
        %1066 = vmatpush.bf16.msra.mxu0 %v1047
        %1067 = vmatpush.bf16.msra.mxu0 %v1046
        %1068 = vmatpush.bf16.msra.mxu0 %v1045
        %1069 = vmatmul.bf16.gmra.mxu0 %v986
        %v1070 = vpop.f32.mrf.mxu0
        %v1071 = vadd.f32 %v1012, %v1070
        %v1072 = vpop.f32.mrf.mxu0
        %v1073 = vadd.f32 %v1012, %v1072
        %1074 = vmatmul.bf16.gmra.mxu0 %v987
        %v1075 = vpop.f32.mrf.mxu0
        %v1076 = vadd.f32 %v1012, %v1075
        %v1077 = vpop.f32.mrf.mxu0
        %v1078 = vadd.f32 %v1012, %v1077
        %1079 = vmatmul.bf16.gmra.mxu0 %v988
        %v1080 = vpop.f32.mrf.mxu0
        %v1081 = vadd.f32 %v1012, %v1080
        %v1082 = vpop.f32.mrf.mxu0
        %v1083 = vadd.f32 %v1012, %v1082
        %1084 = vmatmul.bf16.gmra.mxu0 %v989
        %v1085 = vpop.f32.mrf.mxu0
        %v1086 = vadd.f32 %v1012, %v1085
        %v1087 = vpop.f32.mrf.mxu0
        %v1088 = vadd.f32 %v1012, %v1087
        %1089 = vmatmul.bf16.gmra.mxu0 %v990
        %v1090 = vpop.f32.mrf.mxu0
        %v1091 = vadd.f32 %v1012, %v1090
        %v1092 = vpop.f32.mrf.mxu0
        %v1093 = vadd.f32 %v1012, %v1092
        %1094 = vmatmul.bf16.gmra.mxu0 %v991
        %v1095 = vpop.f32.mrf.mxu0
        %v1096 = vadd.f32 %v1012, %v1095
        %v1097 = vpop.f32.mrf.mxu0
        %v1098 = vadd.f32 %v1012, %v1097
        %1099 = vmatmul.bf16.gmra.mxu0 %v992
        %v1100 = vpop.f32.mrf.mxu0
        %v1101 = vadd.f32 %v1012, %v1100
        %v1102 = vpop.f32.mrf.mxu0
        %v1103 = vadd.f32 %v1012, %v1102
        %1104 = vmatmul.bf16.gmra.mxu0 %v993
        %v1105 = vpop.f32.mrf.mxu0
        %v1106 = vadd.f32 %v1012, %v1105
        %v1107 = vpop.f32.mrf.mxu0
        %v1108 = vadd.f32 %v1012, %v1107
        %1109 = vdwg.mxu0
        %v1110 = vmax.f32 %v1071, 0.0
        %v1111 = vmax.f32 %v1073, 0.0
        %v1112 = vmax.f32 %v1076, 0.0
        %v1113 = vmax.f32 %v1078, 0.0
        %v1114 = vmax.f32 %v1081, 0.0
        %v1115 = vmax.f32 %v1083, 0.0
        %v1116 = vmax.f32 %v1086, 0.0
        %v1117 = vmax.f32 %v1088, 0.0
        %v1118 = vmax.f32 %v1091, 0.0
        %v1119 = vmax.f32 %v1093, 0.0
        %v1120 = vmax.f32 %v1096, 0.0
        %v1121 = vmax.f32 %v1098, 0.0
        %v1122 = vmax.f32 %v1101, 0.0
        %v1123 = vmax.f32 %v1103, 0.0
        %v1124 = vmax.f32 %v1106, 0.0
        %v1125 = vmax.f32 %v1108, 0.0
        %v1126 = vpack.c.bf16 %v1110, %v1110
        %v1127 = vpack.c.bf16 %v1111, %v1111
        %v1128 = vpack.c.bf16 %v1112, %v1112
        %v1129 = vpack.c.bf16 %v1113, %v1113
        %v1130 = vpack.c.bf16 %v1114, %v1114
        %v1131 = vpack.c.bf16 %v1115, %v1115
        %v1132 = vpack.c.bf16 %v1116, %v1116
        %v1133 = vpack.c.bf16 %v1117, %v1117
        %v1134 = vpack.c.bf16 %v1118, %v1118
        %v1135 = vpack.c.bf16 %v1119, %v1119
        %v1136 = vpack.c.bf16 %v1120, %v1120
        %v1137 = vpack.c.bf16 %v1121, %v1121
        %v1138 = vpack.c.bf16 %v1122, %v1122
        %v1139 = vpack.c.bf16 %v1123, %v1123
        %v1140 = vpack.c.bf16 %v1124, %v1124
        %v1141 = vpack.c.bf16 %v1125, %v1125
        %v1142 = vunpack.c.l.bf16 %v790
        %v1143 = vunpack.c.l.bf16 %v791
        %v1144 = vunpack.c.l.bf16 %v792
        %v1145 = vunpack.c.l.bf16 %v793
        %v1146 = vunpack.c.l.bf16 %v794
        %v1147 = vunpack.c.l.bf16 %v795
        %v1148 = vunpack.c.l.bf16 %v796
        %v1149 = vunpack.c.l.bf16 %v797
        %v1150 = vunpack.c.l.bf16 %v798
        %v1151 = vunpack.c.l.bf16 %v799
        %v1152 = vunpack.c.l.bf16 %v800
        %v1153 = vunpack.c.l.bf16 %v801
        %v1154 = vunpack.c.l.bf16 %v802
        %v1155 = vunpack.c.l.bf16 %v803
        %v1156 = vunpack.c.l.bf16 %v804
        %v1157 = vunpack.c.l.bf16 %v805
        %v1158 = vunpack.c.l.bf16 %v1126
        %v1159 = vunpack.c.l.bf16 %v1127
        %v1160 = vunpack.c.l.bf16 %v1128
        %v1161 = vunpack.c.l.bf16 %v1129
        %v1162 = vunpack.c.l.bf16 %v1130
        %v1163 = vunpack.c.l.bf16 %v1131
        %v1164 = vunpack.c.l.bf16 %v1132
        %v1165 = vunpack.c.l.bf16 %v1133
        %v1166 = vunpack.c.l.bf16 %v1134
        %v1167 = vunpack.c.l.bf16 %v1135
        %v1168 = vunpack.c.l.bf16 %v1136
        %v1169 = vunpack.c.l.bf16 %v1137
        %v1170 = vunpack.c.l.bf16 %v1138
        %v1171 = vunpack.c.l.bf16 %v1139
        %v1172 = vunpack.c.l.bf16 %v1140
        %v1173 = vunpack.c.l.bf16 %v1141
        %v1174 = vadd.f32 %v1142, %v1158
        %v1175 = vadd.f32 %v1143, %v1159
        %v1176 = vadd.f32 %v1144, %v1160
        %v1177 = vadd.f32 %v1145, %v1161
        %v1178 = vadd.f32 %v1146, %v1162
        %v1179 = vadd.f32 %v1147, %v1163
        %v1180 = vadd.f32 %v1148, %v1164
        %v1181 = vadd.f32 %v1149, %v1165
        %v1182 = vadd.f32 %v1150, %v1166
        %v1183 = vadd.f32 %v1151, %v1167
        %v1184 = vadd.f32 %v1152, %v1168
        %v1185 = vadd.f32 %v1153, %v1169
        %v1186 = vadd.f32 %v1154, %v1170
        %v1187 = vadd.f32 %v1155, %v1171
        %v1188 = vadd.f32 %v1156, %v1172
        %v1189 = vadd.f32 %v1157, %v1173
        %v1190 = vpack.c.bf16 %v1175, %v1174
        %v1191 = vpack.c.bf16 %v1177, %v1176
        %v1192 = vpack.c.bf16 %v1179, %v1178
        %v1193 = vpack.c.bf16 %v1181, %v1180
        %v1194 = vpack.c.bf16 %v1183, %v1182
        %v1195 = vpack.c.bf16 %v1185, %v1184
        %v1196 = vpack.c.bf16 %v1187, %v1186
        %v1197 = vpack.c.bf16 %v1189, %v1188
        %v1198 = vld [vmem:[%s3] sm:$0xf]
        %v1199 = vld [vmem:[%s3 + $0x4] sm:$0xf]
        %v1200 = vld [vmem:[%s3 + $0x8] sm:$0xf]
        %v1201 = vld [vmem:[%s3 + $0xc] sm:$0xf]
        %v1202 = vld [vmem:[%s3 + $0x10] sm:$0xf]
        %v1203 = vld [vmem:[%s3 + $0x14] sm:$0xf]
        %v1204 = vld [vmem:[%s3 + $0x18] sm:$0xf]
        %v1205 = vld [vmem:[%s3 + $0x1c] sm:$0xf]
        %v1206 = vld [vmem:[%s3 + $0x20] sm:$0xf]
        %v1207 = vld [vmem:[%s3 + $0x24] sm:$0xf]
        %v1208 = vld [vmem:[%s3 + $0x28] sm:$0xf]
        %v1209 = vld [vmem:[%s3 + $0x2c] sm:$0xf]
        %v1210 = vld [vmem:[%s3 + $0x30] sm:$0xf]
        %v1211 = vld [vmem:[%s3 + $0x34] sm:$0xf]
        %v1212 = vld [vmem:[%s3 + $0x38] sm:$0xf]
        %v1213 = vld [vmem:[%s3 + $0x3c] sm:$0xf]
        %v1214 = vld [vmem:[#allocation5 + $0x5] sm:$0x1]
        %v1215 = vperm.slane %v1214, 0
        %v1232 = vunpack.c.l.b16 %v1198
        %v1233 = vunpack.c.l.b16 %v1199
        %v1234 = vunpack.c.l.b16 %v1200
        %v1235 = vunpack.c.l.b16 %v1201
        %v1236 = vunpack.c.l.b16 %v1202
        %v1237 = vunpack.c.l.b16 %v1203
        %v1238 = vunpack.c.l.b16 %v1204
        %v1239 = vunpack.c.l.b16 %v1205
        %v1240 = vunpack.c.l.b16 %v1206
        %v1241 = vunpack.c.l.b16 %v1207
        %v1242 = vunpack.c.l.b16 %v1208
        %v1243 = vunpack.c.l.b16 %v1209
        %v1244 = vunpack.c.l.b16 %v1210
        %v1245 = vunpack.c.l.b16 %v1211
        %v1246 = vunpack.c.l.b16 %v1212
        %v1247 = vunpack.c.l.b16 %v1213
        %v1248 = vpack.c.b16 %v1233, %v1232
        %v1249 = vpack.c.b16 %v1235, %v1234
        %v1250 = vpack.c.b16 %v1237, %v1236
        %v1251 = vpack.c.b16 %v1239, %v1238
        %v1252 = vpack.c.b16 %v1241, %v1240
        %v1253 = vpack.c.b16 %v1243, %v1242
        %v1254 = vpack.c.b16 %v1245, %v1244
        %v1255 = vpack.c.b16 %v1247, %v1246
        %1264 = vmatpush.bf16.msra.mxu0 %v1255
        %1265 = vmatpush.bf16.msra.mxu0 %v1254
        %1266 = vmatpush.bf16.msra.mxu0 %v1253
        %1267 = vmatpush.bf16.msra.mxu0 %v1252
        %1268 = vmatpush.bf16.msra.mxu0 %v1251
        %1269 = vmatpush.bf16.msra.mxu0 %v1250
        %1270 = vmatpush.bf16.msra.mxu0 %v1249
        %1271 = vmatpush.bf16.msra.mxu0 %v1248
        %1272 = vmatmul.bf16.gmra.mxu0 %v1190
        %v1273 = vpop.f32.mrf.mxu0
        %v1274 = vadd.f32 %v1215, %v1273
        %v1275 = vpop.f32.mrf.mxu0
        %v1276 = vadd.f32 %v1215, %v1275
        %1277 = vmatmul.bf16.gmra.mxu0 %v1191
        %v1278 = vpop.f32.mrf.mxu0
        %v1279 = vadd.f32 %v1215, %v1278
        %v1280 = vpop.f32.mrf.mxu0
        %v1281 = vadd.f32 %v1215, %v1280
        %1282 = vmatmul.bf16.gmra.mxu0 %v1192
        %v1283 = vpop.f32.mrf.mxu0
        %v1284 = vadd.f32 %v1215, %v1283
        %v1285 = vpop.f32.mrf.mxu0
        %v1286 = vadd.f32 %v1215, %v1285
        %1287 = vmatmul.bf16.gmra.mxu0 %v1193
        %v1288 = vpop.f32.mrf.mxu0
        %v1289 = vadd.f32 %v1215, %v1288
        %v1290 = vpop.f32.mrf.mxu0
        %v1291 = vadd.f32 %v1215, %v1290
        %1292 = vmatmul.bf16.gmra.mxu0 %v1194
        %v1293 = vpop.f32.mrf.mxu0
        %v1294 = vadd.f32 %v1215, %v1293
        %v1295 = vpop.f32.mrf.mxu0
        %v1296 = vadd.f32 %v1215, %v1295
        %1297 = vmatmul.bf16.gmra.mxu0 %v1195
        %v1298 = vpop.f32.mrf.mxu0
        %v1299 = vadd.f32 %v1215, %v1298
        %v1300 = vpop.f32.mrf.mxu0
        %v1301 = vadd.f32 %v1215, %v1300
        %1302 = vmatmul.bf16.gmra.mxu0 %v1196
        %v1303 = vpop.f32.mrf.mxu0
        %v1304 = vadd.f32 %v1215, %v1303
        %v1305 = vpop.f32.mrf.mxu0
        %v1306 = vadd.f32 %v1215, %v1305
        %1307 = vmatmul.bf16.gmra.mxu0 %v1197
        %v1308 = vpop.f32.mrf.mxu0
        %v1309 = vadd.f32 %v1215, %v1308
        %v1310 = vpop.f32.mrf.mxu0
        %v1311 = vadd.f32 %v1215, %v1310
        %1312 = vdwg.mxu0
        %1313 = vst [vmem:[%s250] sm:$0xff] %v1274
        %1314 = vst [vmem:[%s250 + $0x8] sm:$0xff] %v1276
        %1315 = vst [vmem:[%s250 + $0x10] sm:$0xff] %v1279
        %1316 = vst [vmem:[%s250 + $0x18] sm:$0xff] %v1281
        %1317 = vst [vmem:[%s250 + $0x20] sm:$0xff] %v1284
        %1318 = vst [vmem:[%s250 + $0x28] sm:$0xff] %v1286
        %1319 = vst [vmem:[%s250 + $0x30] sm:$0xff] %v1289
        %1320 = vst [vmem:[%s250 + $0x38] sm:$0xff] %v1291
        %1321 = vst [vmem:[%s250 + $0x40] sm:$0xff] %v1294
        %1322 = vst [vmem:[%s250 + $0x48] sm:$0xff] %v1296
        %1323 = vst [vmem:[%s250 + $0x50] sm:$0xff] %v1299
        %1324 = vst [vmem:[%s250 + $0x58] sm:$0xff] %v1301
        %1325 = vst [vmem:[%s250 + $0x60] sm:$0xff] %v1304
        %1326 = vst [vmem:[%s250 + $0x68] sm:$0xff] %v1306
        %1327 = vst [vmem:[%s250 + $0x70] sm:$0xff] %v1309
        %1328 = vst [vmem:[%s250 + $0x78] sm:$0xff] %v1311
        %s1329 = sand.u32 %s139, 1
        %s1330 = scalar_lea.sflag [#allocation4], %s1329
        %s1331 = sand.u32 %s139, 1
        %s1332 = smul.addr %s1331, 128
        %s1333 = scalar_lea.vmem [#allocation7], %s1332
        // Predicated region
        $region49: #{tpu_custom_call.1} parent=39 // pred_check
          %p1334 = pneg %p149
        $region50: #{tpu_custom_call.1} parent=39 // pred_check_branch
          %1336 = sbr.rel (%p1334) target = $region52
        $region51: #{tpu_custom_call.1} parent=39 // pred_region
          %s1337 = smul.u32 16, %s21
          %1339 = vsyncadd %s1330, 0
          %s1340 = smul.addr %s1337, 8
          %s1341 = scalar_lea.hbm %s5, %s1340
          %s1342 = sshll.u32 %s1333, 4
          %s1343 = int_to_ptr.vmem [resolvable:$true] %s1342
          %s1344 = sshll.u32 %s1341, 4
          %s1345 = int_to_ptr.hbm [resolvable:$true] %s1344
          %1350 = dma.vmem_to_hbm [thread:$0]  %s1343, 2048, %s1345, %s1330, 128, 128, 8
        $region52: #{tpu_custom_call.1} parent=39 // pred_fallthru
          _
      $region40: #{tpu_custom_call.1} parent=5 // pred_fallthru
        _
      %p1351 = scmp.le.s32.totalorder 2, %s16
      // Predicated region
      $region53: #{tpu_custom_call.1} parent=5 // pred_check
        %p1352 = pneg %p1351
      $region54: #{tpu_custom_call.1} parent=5 // pred_check_branch
        %1354 = sbr.rel (%p1352) target = $region56
      $region55: #{tpu_custom_call.1} parent=5 // pred_region
        %s1355 = ssub.s32 %s16, 2
        // Predicated region
        $region57: #{tpu_custom_call.1} parent=55 // pred_check
          %p1356 = pneg %p155
        $region58: #{tpu_custom_call.1} parent=55 // pred_check_branch
          %1358 = sbr.rel (%p1356) target = $region60
        $region59: #{tpu_custom_call.1} parent=55 // pred_region
          %s1359 = sand.u32 %s140, 1
          %s1360 = scalar_lea.sflag [#allocation4], %s1359
          %s1361 = sand.u32 %s140, 1
          %s1362 = smul.addr %s1361, 128
          %s1363 = scalar_lea.vmem [#allocation7], %s1362
          %1365 = dma.done %s1360, 2048
        $region60: #{tpu_custom_call.1} parent=55 // pred_fallthru
          _
      $region56: #{tpu_custom_call.1} parent=5 // pred_fallthru
        _
    $region6: #{tpu_custom_call.1} parent=1 // loop_footer
      %s20 = sadd.s32 1, %s16
    $region7: #{tpu_custom_call.1} parent=1 // loop_footer_branch
      %15 = sbr.rel target = $region3
    $region8: #{tpu_custom_call.1} parent=1 // loop_exit
      _
    %1366 = vsyncpa [#allocation3], 1
    %s1367 = scalar_lea.sflag [#allocation3], 1
    %1368 = vsyncpa %s1367, 1
    %1369 = vsyncpa [#allocation6], 1
    %1370 = vsyncpa [#allocation4], 1
    %s1371 = scalar_lea.sflag [#allocation4], 1
    %1372 = vsyncpa %s1371, 1

// kernel: tpu_custom_call.1
$region0: #{tpu_custom_call.1}
  #allocation0 [shape = 'u32[]', space=smem, size = 0x4, offset = 0x4, fixed_abs, tag = 'smem constant byte address 0x4 - core index']
  #allocation1 [shape = 'u32[72,128]{1,0:T(1,128)}', space=vmem, size = 0x9000, scoped, tag = 'internal scratch']
  %s0 = inlined_call_operand.vmem [shape: f32[256,32], index: 0, kind: input, shape index: {}]
  %s1 = inlined_call_operand.hbm [shape: bf16[32,128], index: 1, kind: input, shape index: {}]
  %s2 = inlined_call_operand.vmem [shape: bf16[2,2,128,128], index: 2, kind: input, shape index: {}]
  %s3 = inlined_call_operand.vmem [shape: bf16[128,128], index: 3, kind: input, shape index: {}]
  %s4 = inlined_call_operand.hbm [shape: f32[6,128], index: 4, kind: input, shape index: {}]
  %s5 = inlined_call_operand.hbm [shape: f32[256,128], index: 5, kind: output, shape index: {}]
  %s6 = sld [smem:[#allocation0]]
  $region61: #{tpu_custom_call.1} parent=0
    _
  %s8 = ssub.s32 1, %s6
  %s9 = scalar_select 0, %s8, %s6
  $region1: #{tpu_custom_call.1} parent=0
    #allocation2 [shape = 'u8[8192]{0}', space=vmem, size = 0x2000, scoped, tag = 'input window, operand 1, single buffered']
    #allocation3 [shape = 's32[2]{0}', space=sflag, size = 0x8, scoped, tag = 'scoped memory for tpu_custom_call.1']
    #allocation4 [shape = 's32[2]{0}', space=sflag, size = 0x8, scoped, tag = 'scoped memory for tpu_custom_call.1']
    #allocation5 [shape = 'u8[4096]{0}', space=vmem, size = 0x1000, scoped, tag = 'input window, operand 4, single buffered']
    #allocation6 [shape = 's32[1]{0}', space=sflag, size = 0x4, scoped, tag = 'scoped memory for tpu_custom_call.1']
    #allocation7 [shape = 'u8[131072]{0}', space=vmem, size = 0x20000, scoped, tag = 'output window, operand 0']
    %10 = vsyncpa [#allocation3], 0
    %11 = vsyncpa [#allocation6], 0
    %12 = vsyncpa [#allocation4], 0
    %s13 = scalar_lea.sflag [#allocation4], 1
    %14 = vsyncpa %s13, 0
    loop: start=0, step=1, limit=4
    $region2: #{tpu_custom_call.1} parent=1 // loop_pre_header
      _
    $region3: #{tpu_custom_call.1} parent=1 // loop_header
      %s16 = sphi 0, %s20
      %p17 = scmp.ge.s32.totalorder %s16, 4
      %s26 = sphi 0, %s28
      %s29 = sphi 0, %s26
      %s30 = sphi 0, %s29
      %s46 = sphi 0, %s30
      %s50 = sphi 0, %s50
      %s52 = sphi 0, %s50
      %s53 = sphi 0, %s52
      %s67 = sphi 0, %s53
      %s71 = sphi 0, %s71
      %s73 = sphi 0, %s71
      %s74 = sphi 0, %s73
      %s88 = sphi 0, %s74
      %s92 = sphi 0, %s92
      %s94 = sphi 0, %s92
      %s95 = sphi 0, %s94
      %s109 = sphi 0, %s95
      %s113 = sphi 0, %s113
      %s115 = sphi 0, %s113
      %s116 = sphi 0, %s115
      %s130 = sphi 0, %s116
      %s136 = sphi 0, %s138
      %s139 = sphi 0, %s136
      %s140 = sphi 0, %s139
      %s156 = sphi 0, %s140
    $region4: #{tpu_custom_call.1} parent=1 // loop_header_branch
      %19 = sbr.rel (%p17) target = $region8
    $region5: #{tpu_custom_call.1} parent=1 // loop_body
      %s21 = ssub.s32 %s16, 1
      %s22 = ssub.s32 %s16, 2
      %s23 = sadd.s32 %s16, 1
      %s24 = ssub.s32 %s16, %s23
      %p25 = scmp.eq.s32.totalorder %s24, 0
      %s27 = sadd.s32 %s26, 1
      %s28 = scalar_select %p25, %s26, %s27
      %p31 = pneg %p25
      %p32 = scmp.eq.s32.totalorder %s16, 1
      %p33 = por %p31, %p32
      %p34 = scmp.ne.s32.totalorder %s26, %s29
      %p35 = scmp.eq.s32.totalorder %s16, 0
      %p36 = por %p34, %p35
      %p37 = scmp.ne.s32.totalorder %s26, %s29
      %p38 = scmp.eq.s32.totalorder %s21, 1
      %p39 = por %p37, %p38
      %p40 = scmp.ne.s32.totalorder %s29, %s30
      %p41 = scmp.eq.s32.totalorder %s21, 0
      %p42 = por %p40, %p41
      %p43 = scmp.ne.s32.totalorder %s29, %s30
      %p44 = scmp.eq.s32.totalorder %s22, 1
      %p45 = por %p43, %p44
      %p47 = scmp.ne.s32.totalorder %s30, %s46
      %p48 = scmp.eq.s32.totalorder %s22, 0
      %p49 = por %p47, %p48
      %s51 = sadd.s32 %s50, 1
      %p54 = scmp.eq.s32.totalorder %s16, 1
      %p55 = scmp.ne.s32.totalorder %s50, %s52
      %p56 = scmp.eq.s32.totalorder %s16, 0
      %p57 = por %p55, %p56
      %p58 = scmp.ne.s32.totalorder %s50, %s52
      %p59 = scmp.eq.s32.totalorder %s21, 1
      %p60 = por %p58, %p59
      %p61 = scmp.ne.s32.totalorder %s52, %s53
      %p62 = scmp.eq.s32.totalorder %s21, 0
      %p63 = por %p61, %p62
      %p64 = scmp.ne.s32.totalorder %s52, %s53
      %p65 = scmp.eq.s32.totalorder %s22, 1
      %p66 = por %p64, %p65
      %p68 = scmp.ne.s32.totalorder %s53, %s67
      %p69 = scmp.eq.s32.totalorder %s22, 0
      %p70 = por %p68, %p69
      %s72 = sadd.s32 %s71, 1
      %p75 = scmp.eq.s32.totalorder %s16, 1
      %p76 = scmp.ne.s32.totalorder %s71, %s73
      %p77 = scmp.eq.s32.totalorder %s16, 0
      %p78 = por %p76, %p77
      %p79 = scmp.ne.s32.totalorder %s71, %s73
      %p80 = scmp.eq.s32.totalorder %s21, 1
      %p81 = por %p79, %p80
      %p82 = scmp.ne.s32.totalorder %s73, %s74
      %p83 = scmp.eq.s32.totalorder %s21, 0
      %p84 = por %p82, %p83
      %p85 = scmp.ne.s32.totalorder %s73, %s74
      %p86 = scmp.eq.s32.totalorder %s22, 1
      %p87 = por %p85, %p86
      %p89 = scmp.ne.s32.totalorder %s74, %s88
      %p90 = scmp.eq.s32.totalorder %s22, 0
      %p91 = por %p89, %p90
      %s93 = sadd.s32 %s92, 1
      %p96 = scmp.eq.s32.totalorder %s16, 1
      %p97 = scmp.ne.s32.totalorder %s92, %s94
      %p98 = scmp.eq.s32.totalorder %s16, 0
      %p99 = por %p97, %p98
      %p100 = scmp.ne.s32.totalorder %s92, %s94
      %p101 = scmp.eq.s32.totalorder %s21, 1
      %p102 = por %p100, %p101
      %p103 = scmp.ne.s32.totalorder %s94, %s95
      %p104 = scmp.eq.s32.totalorder %s21, 0
      %p105 = por %p103, %p104
      %p106 = scmp.ne.s32.totalorder %s94, %s95
      %p107 = scmp.eq.s32.totalorder %s22, 1
      %p108 = por %p106, %p107
      %p110 = scmp.ne.s32.totalorder %s95, %s109
      %p111 = scmp.eq.s32.totalorder %s22, 0
      %p112 = por %p110, %p111
      %s114 = sadd.s32 %s113, 1
      %p117 = scmp.eq.s32.totalorder %s16, 1
      %p118 = scmp.ne.s32.totalorder %s113, %s115
      %p119 = scmp.eq.s32.totalorder %s16, 0
      %p120 = por %p118, %p119
      %p121 = scmp.ne.s32.totalorder %s113, %s115
      %p122 = scmp.eq.s32.totalorder %s21, 1
      %p123 = por %p121, %p122
      %p124 = scmp.ne.s32.totalorder %s115, %s116
      %p125 = scmp.eq.s32.totalorder %s21, 0
      %p126 = por %p124, %p125
      %p127 = scmp.ne.s32.totalorder %s115, %s116
      %p128 = scmp.eq.s32.totalorder %s22, 1
      %p129 = por %p127, %p128
      %p131 = scmp.ne.s32.totalorder %s116, %s130
      %p132 = scmp.eq.s32.totalorder %s22, 0
      %p133 = por %p131, %p132
      %s134 = ssub.s32 %s16, %s23
      %p135 = scmp.eq.s32.totalorder %s134, 0
      %s137 = sadd.s32 %s136, 1
      %s138 = scalar_select %p135, %s136, %s137
      %p141 = pneg %p135
      %p142 = scmp.eq.s32.totalorder %s16, 1
      %p143 = por %p141, %p142
      %p144 = scmp.ne.s32.totalorder %s136, %s139
      %p145 = scmp.eq.s32.totalorder %s16, 0
      %p146 = por %p144, %p145
      %p147 = scmp.ne.s32.totalorder %s136, %s139
      %p148 = scmp.eq.s32.totalorder %s21, 1
      %p149 = por %p147, %p148
      %p150 = scmp.ne.s32.totalorder %s139, %s140
      %p151 = scmp.eq.s32.totalorder %s21, 0
      %p152 = por %p150, %p151
      %p153 = scmp.ne.s32.totalorder %s139, %s140
      %p154 = scmp.eq.s32.totalorder %s22, 1
      %p155 = por %p153, %p154
      %p157 = scmp.ne.s32.totalorder %s140, %s156
      %p158 = scmp.eq.s32.totalorder %s22, 0
      %p159 = por %p157, %p158
      %p160 = scmp.le.s32.totalorder 1, %s16
      %p161 = scmp.lt.s32.totalorder %s16, 3
      %p162 = pnand %p160, %p161
      %p163 = pneg %p162
      // Predicated region
      $region9: #{tpu_custom_call.1} parent=5 // pred_check
        _
      $region10: #{tpu_custom_call.1} parent=5 // pred_check_branch
        %165 = sbr.rel (%p162) target = $region12
      $region11: #{tpu_custom_call.1} parent=5 // pred_region
        %s166 = ssub.s32 %s16, 1
        // Predicated region
        $region13: #{tpu_custom_call.1} parent=11 // pred_check
          %p167 = pneg %p63
        $region14: #{tpu_custom_call.1} parent=11 // pred_check_branch
          %169 = sbr.rel (%p167) target = $region16
        $region15: #{tpu_custom_call.1} parent=11 // pred_region
          %171 = vsyncadd [#allocation3], 0
          %s172 = sshll.u32 %s1, 4
          %s173 = int_to_ptr.hbm [resolvable:$true] %s172
          %s174 = sshll.u32 [#allocation2], 4
          %s175 = int_to_ptr.vmem [resolvable:$true] %s174
          %180 = dma.hbm_to_vmem [thread:$0]  %s173, 256, %s175, [#allocation3], 64, 64, 4
        $region16: #{tpu_custom_call.1} parent=11 // pred_fallthru
          _
        // Predicated region
        $region17: #{tpu_custom_call.1} parent=11 // pred_check
          %p181 = pneg %p84
        $region18: #{tpu_custom_call.1} parent=11 // pred_check_branch
          %183 = sbr.rel (%p181) target = $region20
        $region19: #{tpu_custom_call.1} parent=11 // pred_region
          _
        $region20: #{tpu_custom_call.1} parent=11 // pred_fallthru
          _
        // Predicated region
        $region21: #{tpu_custom_call.1} parent=11 // pred_check
          %p184 = pneg %p105
        $region22: #{tpu_custom_call.1} parent=11 // pred_check_branch
          %186 = sbr.rel (%p184) target = $region24
        $region23: #{tpu_custom_call.1} parent=11 // pred_region
          _
        $region24: #{tpu_custom_call.1} parent=11 // pred_fallthru
          _
        // Predicated region
        $region25: #{tpu_custom_call.1} parent=11 // pred_check
          %p187 = pneg %p126
        $region26: #{tpu_custom_call.1} parent=11 // pred_check_branch
          %189 = sbr.rel (%p187) target = $region28
        $region27: #{tpu_custom_call.1} parent=11 // pred_region
          %191 = vsyncadd [#allocation6], 0
          %s193 = sshll.u32 %s4, 4
          %s194 = int_to_ptr.hbm [resolvable:$true] %s193
          %s195 = sshll.u32 [#allocation5], 4
          %s196 = int_to_ptr.vmem [resolvable:$true] %s195
          %198 = dma.hbm_to_vmem [thread:$0]  %s194, 128, %s196, [#allocation6]
        $region28: #{tpu_custom_call.1} parent=11 // pred_fallthru
          _
      $region12: #{tpu_custom_call.1} parent=5 // pred_fallthru
        _
      %p199 = scmp.lt.s32.totalorder %s16, 2
      // Predicated region
      $region29: #{tpu_custom_call.1} parent=5 // pred_check
        %p200 = pneg %p199
      $region30: #{tpu_custom_call.1} parent=5 // pred_check_branch
        %202 = sbr.rel (%p200) target = $region32
      $region31: #{tpu_custom_call.1} parent=5 // pred_region
        // Predicated region
        $region33: #{tpu_custom_call.1} parent=31 // pred_check
          %p203 = pneg %p36
        $region34: #{tpu_custom_call.1} parent=31 // pred_check_branch
          %205 = sbr.rel (%p203) target = $region36
        $region35: #{tpu_custom_call.1} parent=31 // pred_region
          %s206 = smul.u32 16, %s16
          %p207 = scmp.lt.s32.totalorder %s206, 31
          %s208 = scalar_select %p207, %s206, 31
          %s209 = smul.addr %s208, 8
          %s210 = scalar_lea.vmem %s0, %s209
          %s211 = smul.u32 16, %s16
        $region36: #{tpu_custom_call.1} parent=31 // pred_fallthru
          _
      $region32: #{tpu_custom_call.1} parent=5 // pred_fallthru
        _
      %p212 = scmp.le.s32.totalorder 1, %s16
      %p213 = scmp.lt.s32.totalorder %s16, 3
      %p214 = pnand %p212, %p213
      %p215 = pneg %p214
      // Predicated region
      $region37: #{tpu_custom_call.1} parent=5 // pred_check
        _
      $region38: #{tpu_custom_call.1} parent=5 // pred_check_branch
        %217 = sbr.rel (%p214) target = $region40
      $region39: #{tpu_custom_call.1} parent=5 // pred_region
        %s218 = ssub.s32 %s16, 1
        // Predicated region
        $region41: #{tpu_custom_call.1} parent=39 // pred_check
          %p219 = pneg %p63
        $region42: #{tpu_custom_call.1} parent=39 // pred_check_branch
          %221 = sbr.rel (%p219) target = $region44
        $region43: #{tpu_custom_call.1} parent=39 // pred_region
          %223 = dma.done [#allocation3], 256
        $region44: #{tpu_custom_call.1} parent=39 // pred_fallthru
          _
        // Predicated region
        $region45: #{tpu_custom_call.1} parent=39 // pred_check
          %p224 = pneg %p126
        $region46: #{tpu_custom_call.1} parent=39 // pred_check_branch
          %226 = sbr.rel (%p224) target = $region48
        $region47: #{tpu_custom_call.1} parent=39 // pred_region
          %228 = dma.done [#allocation6], 128
        $region48: #{tpu_custom_call.1} parent=39 // pred_fallthru
          _
        %s229 = smul.u32 16, %s21
        %p230 = scmp.lt.s32.totalorder %s229, 31
        %s231 = scalar_select %p230, %s229, 31
        %s232 = smul.addr %s231, 8
        %s233 = scalar_lea.vmem %s0, %s232
        %p234 = pneg %p42
        %p235 = pneg %p39
        %p236 = pneg %p63
        %p237 = pneg %p60
        %p238 = pneg %p84
        %p239 = pneg %p81
        %p240 = pneg %p105
        %p241 = pneg %p102
        %p242 = pneg %p126
        %p243 = pneg %p123
        %p244 = pneg %p152
        %p245 = pneg %p149
        %s246 = sand.u32 %s139, 1
        %s247 = scalar_lea.sflag [#allocation4], %s246
        %s248 = sand.u32 %s139, 1
        %s249 = smul.addr %s248, 128
        %s250 = scalar_lea.vmem [#allocation7], %s249
        %s251 = smul.u32 16, %s21
        %p252 = scmp.lt.s32.totalorder %s251, 31
        %s253 = scalar_select %p252, %s251, 31
        %s254 = smul.addr %s253, 8
        %s255 = scalar_lea.vmem %s0, %s254
        %s256 = smul.u32 16, %s21
        %s257 = smul.u32 16, %s21
        %v259 = vld [vmem:[%s255] sm:$0xff]
        %v260 = vld [vmem:[%s255 + $0x8] sm:$0xff]
        %v261 = vld [vmem:[%s255 + $0x10] sm:$0xff]
        %v262 = vld [vmem:[%s255 + $0x18] sm:$0xff]
        %v263 = vld [vmem:[%s255 + $0x20] sm:$0xff]
        %v264 = vld [vmem:[%s255 + $0x28] sm:$0xff]
        %v265 = vld [vmem:[%s255 + $0x30] sm:$0xff]
        %v266 = vld [vmem:[%s255 + $0x38] sm:$0xff]
        %v267 = vld [vmem:[%s255 + $0x40] sm:$0xff]
        %v268 = vld [vmem:[%s255 + $0x48] sm:$0xff]
        %v269 = vld [vmem:[%s255 + $0x50] sm:$0xff]
        %v270 = vld [vmem:[%s255 + $0x58] sm:$0xff]
        %v271 = vld [vmem:[%s255 + $0x60] sm:$0xff]
        %v272 = vld [vmem:[%s255 + $0x68] sm:$0xff]
        %v273 = vld [vmem:[%s255 + $0x70] sm:$0xff]
        %v274 = vld [vmem:[%s255 + $0x78] sm:$0xff]
        %v275 = vpack.c.bf16 %v260, %v259
        %v276 = vpack.c.bf16 %v262, %v261
        %v277 = vpack.c.bf16 %v264, %v263
        %v278 = vpack.c.bf16 %v266, %v265
        %v279 = vpack.c.bf16 %v268, %v267
        %v280 = vpack.c.bf16 %v270, %v269
        %v281 = vpack.c.bf16 %v272, %v271
        %v282 = vpack.c.bf16 %v274, %v273
        %v283 = vld [vmem:[#allocation2] sm:$0xf]
        %v284 = vld [vmem:[#allocation2 + $0x4] sm:$0xf]
        %v285 = vld [vmem:[#allocation2 + $0x8] sm:$0xf]
        %v286 = vld [vmem:[#allocation2 + $0xc] sm:$0xf]
        %v287 = vld [vmem:[#allocation5] sm:$0x1]
        %v288 = vperm.slane %v287, 0
        %v293 = vunpack.c.l.b16 %v283
        %v294 = vunpack.c.l.b16 %v284
        %v295 = vunpack.c.l.b16 %v285
        %v296 = vunpack.c.l.b16 %v286
        %v297 = vpack.c.b16 %v294, %v293
        %v298 = vpack.c.b16 %v296, %v295
        %vm301 = vcmask 261120
        %v303 = vsel %vm301, %v275, 0
        %v306 = vsel %vm301, %v276, 0
        %v309 = vsel %vm301, %v277, 0
        %v312 = vsel %vm301, %v278, 0
        %v315 = vsel %vm301, %v279, 0
        %v318 = vsel %vm301, %v280, 0
        %v321 = vsel %vm301, %v281, 0
        %v324 = vsel %vm301, %v282, 0
        %326 = vmatpush.bf16.msra.mxu0 0
        %327 = vmatpush.bf16.msra.mxu0 0
        %328 = vmatpush.bf16.msra.mxu0 0
        %329 = vmatpush.bf16.msra.mxu0 0
        %330 = vmatpush.bf16.msra.mxu0 0
        %331 = vmatpush.bf16.msra.mxu0 0
        %332 = vmatpush.bf16.msra.mxu0 %v298
        %333 = vmatpush.bf16.msra.mxu0 %v297
        %334 = vmatmul.bf16.gmra.mxu0 %v303
        %v335 = vpop.f32.mrf.mxu0
        %v336 = vadd.f32 %v288, %v335
        %v337 = vpop.f32.mrf.mxu0
        %v338 = vadd.f32 %v288, %v337
        %339 = vmatmul.bf16.gmra.mxu0 %v306
        %v340 = vpop.f32.mrf.mxu0
        %v341 = vadd.f32 %v288, %v340
        %v342 = vpop.f32.mrf.mxu0
        %v343 = vadd.f32 %v288, %v342
        %344 = vmatmul.bf16.gmra.mxu0 %v309
        %v345 = vpop.f32.mrf.mxu0
        %v346 = vadd.f32 %v288, %v345
        %v347 = vpop.f32.mrf.mxu0
        %v348 = vadd.f32 %v288, %v347
        %349 = vmatmul.bf16.gmra.mxu0 %v312
        %v350 = vpop.f32.mrf.mxu0
        %v351 = vadd.f32 %v288, %v350
        %v352 = vpop.f32.mrf.mxu0
        %v353 = vadd.f32 %v288, %v352
        %354 = vmatmul.bf16.gmra.mxu0 %v315
        %v355 = vpop.f32.mrf.mxu0
        %v356 = vadd.f32 %v288, %v355
        %v357 = vpop.f32.mrf.mxu0
        %v358 = vadd.f32 %v288, %v357
        %359 = vmatmul.bf16.gmra.mxu0 %v318
        %v360 = vpop.f32.mrf.mxu0
        %v361 = vadd.f32 %v288, %v360
        %v362 = vpop.f32.mrf.mxu0
        %v363 = vadd.f32 %v288, %v362
        %364 = vmatmul.bf16.gmra.mxu0 %v321
        %v365 = vpop.f32.mrf.mxu0
        %v366 = vadd.f32 %v288, %v365
        %v367 = vpop.f32.mrf.mxu0
        %v368 = vadd.f32 %v288, %v367
        %369 = vmatmul.bf16.gmra.mxu0 %v324
        %v370 = vpop.f32.mrf.mxu0
        %v371 = vadd.f32 %v288, %v370
        %v372 = vpop.f32.mrf.mxu0
        %v373 = vadd.f32 %v288, %v372
        %374 = vdwg.mxu0
        %v375 = vmax.f32 %v336, 0.0
        %v376 = vmax.f32 %v338, 0.0
        %v377 = vmax.f32 %v341, 0.0
        %v378 = vmax.f32 %v343, 0.0
        %v379 = vmax.f32 %v346, 0.0
        %v380 = vmax.f32 %v348, 0.0
        %v381 = vmax.f32 %v351, 0.0
        %v382 = vmax.f32 %v353, 0.0
        %v383 = vmax.f32 %v356, 0.0
        %v384 = vmax.f32 %v358, 0.0
        %v385 = vmax.f32 %v361, 0.0
        %v386 = vmax.f32 %v363, 0.0
        %v387 = vmax.f32 %v366, 0.0
        %v388 = vmax.f32 %v368, 0.0
        %v389 = vmax.f32 %v371, 0.0
        %v390 = vmax.f32 %v373, 0.0
        %v391 = vpack.c.bf16 %v375, %v375
        %v392 = vpack.c.bf16 %v376, %v376
        %v393 = vpack.c.bf16 %v377, %v377
        %v394 = vpack.c.bf16 %v378, %v378
        %v395 = vpack.c.bf16 %v379, %v379
        %v396 = vpack.c.bf16 %v380, %v380
        %v397 = vpack.c.bf16 %v381, %v381
        %v398 = vpack.c.bf16 %v382, %v382
        %v399 = vpack.c.bf16 %v383, %v383
        %v400 = vpack.c.bf16 %v384, %v384
        %v401 = vpack.c.bf16 %v385, %v385
        %v402 = vpack.c.bf16 %v386, %v386
        %v403 = vpack.c.bf16 %v387, %v387
        %v404 = vpack.c.bf16 %v388, %v388
        %v405 = vpack.c.bf16 %v389, %v389
        %v406 = vpack.c.bf16 %v390, %v390
        %v407 = vld [vmem:[%s2] sm:$0xf]
        %v408 = vld [vmem:[%s2 + $0x4] sm:$0xf]
        %v409 = vld [vmem:[%s2 + $0x8] sm:$0xf]
        %v410 = vld [vmem:[%s2 + $0xc] sm:$0xf]
        %v411 = vld [vmem:[%s2 + $0x10] sm:$0xf]
        %v412 = vld [vmem:[%s2 + $0x14] sm:$0xf]
        %v413 = vld [vmem:[%s2 + $0x18] sm:$0xf]
        %v414 = vld [vmem:[%s2 + $0x1c] sm:$0xf]
        %v415 = vld [vmem:[%s2 + $0x20] sm:$0xf]
        %v416 = vld [vmem:[%s2 + $0x24] sm:$0xf]
        %v417 = vld [vmem:[%s2 + $0x28] sm:$0xf]
        %v418 = vld [vmem:[%s2 + $0x2c] sm:$0xf]
        %v419 = vld [vmem:[%s2 + $0x30] sm:$0xf]
        %v420 = vld [vmem:[%s2 + $0x34] sm:$0xf]
        %v421 = vld [vmem:[%s2 + $0x38] sm:$0xf]
        %v422 = vld [vmem:[%s2 + $0x3c] sm:$0xf]
        %v423 = vld [vmem:[#allocation5 + $0x1] sm:$0x1]
        %v424 = vperm.slane %v423, 0
        %v441 = vunpack.c.l.b16 %v391
        %v442 = vunpack.c.l.b16 %v392
        %v443 = vunpack.c.l.b16 %v393
        %v444 = vunpack.c.l.b16 %v394
        %v445 = vunpack.c.l.b16 %v395
        %v446 = vunpack.c.l.b16 %v396
        %v447 = vunpack.c.l.b16 %v397
        %v448 = vunpack.c.l.b16 %v398
        %v449 = vunpack.c.l.b16 %v399
        %v450 = vunpack.c.l.b16 %v400
        %v451 = vunpack.c.l.b16 %v401
        %v452 = vunpack.c.l.b16 %v402
        %v453 = vunpack.c.l.b16 %v403
        %v454 = vunpack.c.l.b16 %v404
        %v455 = vunpack.c.l.b16 %v405
        %v456 = vunpack.c.l.b16 %v406
        %v457 = vpack.c.b16 %v442, %v441
        %v458 = vpack.c.b16 %v444, %v443
        %v459 = vpack.c.b16 %v446, %v445
        %v460 = vpack.c.b16 %v448, %v447
        %v461 = vpack.c.b16 %v450, %v449
        %v462 = vpack.c.b16 %v452, %v451
        %v463 = vpack.c.b16 %v454, %v453
        %v464 = vpack.c.b16 %v456, %v455
        %v489 = vunpack.c.l.b16 %v407
        %v490 = vunpack.c.l.b16 %v408
        %v491 = vunpack.c.l.b16 %v409
        %v492 = vunpack.c.l.b16 %v410
        %v493 = vunpack.c.l.b16 %v411
        %v494 = vunpack.c.l.b16 %v412
        %v495 = vunpack.c.l.b16 %v413
        %v496 = vunpack.c.l.b16 %v414
        %v497 = vunpack.c.l.b16 %v415
        %v498 = vunpack.c.l.b16 %v416
        %v499 = vunpack.c.l.b16 %v417
        %v500 = vunpack.c.l.b16 %v418
        %v501 = vunpack.c.l.b16 %v419
        %v502 = vunpack.c.l.b16 %v420
        %v503 = vunpack.c.l.b16 %v421
        %v504 = vunpack.c.l.b16 %v422
        %v505 = vpack.c.b16 %v490, %v489
        %v506 = vpack.c.b16 %v492, %v491
        %v507 = vpack.c.b16 %v494, %v493
        %v508 = vpack.c.b16 %v496, %v495
        %v509 = vpack.c.b16 %v498, %v497
        %v510 = vpack.c.b16 %v500, %v499
        %v511 = vpack.c.b16 %v502, %v501
        %v512 = vpack.c.b16 %v504, %v503
        %521 = vmatpush.bf16.msra.mxu0 %v512
        %522 = vmatpush.bf16.msra.mxu0 %v511
        %523 = vmatpush.bf16.msra.mxu0 %v510
        %524 = vmatpush.bf16.msra.mxu0 %v509
        %525 = vmatpush.bf16.msra.mxu0 %v508
        %526 = vmatpush.bf16.msra.mxu0 %v507
        %527 = vmatpush.bf16.msra.mxu0 %v506
        %528 = vmatpush.bf16.msra.mxu0 %v505
        %529 = vmatmul.bf16.gmra.mxu0 %v457
        %v530 = vpop.f32.mrf.mxu0
        %v531 = vadd.f32 %v424, %v530
        %v532 = vpop.f32.mrf.mxu0
        %v533 = vadd.f32 %v424, %v532
        %534 = vmatmul.bf16.gmra.mxu0 %v458
        %v535 = vpop.f32.mrf.mxu0
        %v536 = vadd.f32 %v424, %v535
        %v537 = vpop.f32.mrf.mxu0
        %v538 = vadd.f32 %v424, %v537
        %539 = vmatmul.bf16.gmra.mxu0 %v459
        %v540 = vpop.f32.mrf.mxu0
        %v541 = vadd.f32 %v424, %v540
        %v542 = vpop.f32.mrf.mxu0
        %v543 = vadd.f32 %v424, %v542
        %544 = vmatmul.bf16.gmra.mxu0 %v460
        %v545 = vpop.f32.mrf.mxu0
        %v546 = vadd.f32 %v424, %v545
        %v547 = vpop.f32.mrf.mxu0
        %v548 = vadd.f32 %v424, %v547
        %549 = vmatmul.bf16.gmra.mxu0 %v461
        %v550 = vpop.f32.mrf.mxu0
        %v551 = vadd.f32 %v424, %v550
        %v552 = vpop.f32.mrf.mxu0
        %v553 = vadd.f32 %v424, %v552
        %554 = vmatmul.bf16.gmra.mxu0 %v462
        %v555 = vpop.f32.mrf.mxu0
        %v556 = vadd.f32 %v424, %v555
        %v557 = vpop.f32.mrf.mxu0
        %v558 = vadd.f32 %v424, %v557
        %559 = vmatmul.bf16.gmra.mxu0 %v463
        %v560 = vpop.f32.mrf.mxu0
        %v561 = vadd.f32 %v424, %v560
        %v562 = vpop.f32.mrf.mxu0
        %v563 = vadd.f32 %v424, %v562
        %564 = vmatmul.bf16.gmra.mxu0 %v464
        %v565 = vpop.f32.mrf.mxu0
        %v566 = vadd.f32 %v424, %v565
        %v567 = vpop.f32.mrf.mxu0
        %v568 = vadd.f32 %v424, %v567
        %569 = vdwg.mxu0
        %v570 = vmax.f32 %v531, 0.0
        %v571 = vmax.f32 %v533, 0.0
        %v572 = vmax.f32 %v536, 0.0
        %v573 = vmax.f32 %v538, 0.0
        %v574 = vmax.f32 %v541, 0.0
        %v575 = vmax.f32 %v543, 0.0
        %v576 = vmax.f32 %v546, 0.0
        %v577 = vmax.f32 %v548, 0.0
        %v578 = vmax.f32 %v551, 0.0
        %v579 = vmax.f32 %v553, 0.0
        %v580 = vmax.f32 %v556, 0.0
        %v581 = vmax.f32 %v558, 0.0
        %v582 = vmax.f32 %v561, 0.0
        %v583 = vmax.f32 %v563, 0.0
        %v584 = vmax.f32 %v566, 0.0
        %v585 = vmax.f32 %v568, 0.0
        %v586 = vpack.c.bf16 %v571, %v570
        %v587 = vpack.c.bf16 %v573, %v572
        %v588 = vpack.c.bf16 %v575, %v574
        %v589 = vpack.c.bf16 %v577, %v576
        %v590 = vpack.c.bf16 %v579, %v578
        %v591 = vpack.c.bf16 %v581, %v580
        %v592 = vpack.c.bf16 %v583, %v582
        %v593 = vpack.c.bf16 %v585, %v584
        %s594 = scalar_lea.vmem %s2, 64
        %v595 = vld [vmem:[%s594] sm:$0xf]
        %v596 = vld [vmem:[%s594 + $0x4] sm:$0xf]
        %v597 = vld [vmem:[%s594 + $0x8] sm:$0xf]
        %v598 = vld [vmem:[%s594 + $0xc] sm:$0xf]
        %v599 = vld [vmem:[%s594 + $0x10] sm:$0xf]
        %v600 = vld [vmem:[%s594 + $0x14] sm:$0xf]
        %v601 = vld [vmem:[%s594 + $0x18] sm:$0xf]
        %v602 = vld [vmem:[%s594 + $0x1c] sm:$0xf]
        %v603 = vld [vmem:[%s594 + $0x20] sm:$0xf]
        %v604 = vld [vmem:[%s594 + $0x24] sm:$0xf]
        %v605 = vld [vmem:[%s594 + $0x28] sm:$0xf]
        %v606 = vld [vmem:[%s594 + $0x2c] sm:$0xf]
        %v607 = vld [vmem:[%s594 + $0x30] sm:$0xf]
        %v608 = vld [vmem:[%s594 + $0x34] sm:$0xf]
        %v609 = vld [vmem:[%s594 + $0x38] sm:$0xf]
        %v610 = vld [vmem:[%s594 + $0x3c] sm:$0xf]
        %v611 = vld [vmem:[#allocation5 + $0x2] sm:$0x1]
        %v612 = vperm.slane %v611, 0
        %v629 = vunpack.c.l.b16 %v595
        %v630 = vunpack.c.l.b16 %v596
        %v631 = vunpack.c.l.b16 %v597
        %v632 = vunpack.c.l.b16 %v598
        %v633 = vunpack.c.l.b16 %v599
        %v634 = vunpack.c.l.b16 %v600
        %v635 = vunpack.c.l.b16 %v601
        %v636 = vunpack.c.l.b16 %v602
        %v637 = vunpack.c.l.b16 %v603
        %v638 = vunpack.c.l.b16 %v604
        %v639 = vunpack.c.l.b16 %v605
        %v640 = vunpack.c.l.b16 %v606
        %v641 = vunpack.c.l.b16 %v607
        %v642 = vunpack.c.l.b16 %v608
        %v643 = vunpack.c.l.b16 %v609
        %v644 = vunpack.c.l.b16 %v610
        %v645 = vpack.c.b16 %v630, %v629
        %v646 = vpack.c.b16 %v632, %v631
        %v647 = vpack.c.b16 %v634, %v633
        %v648 = vpack.c.b16 %v636, %v635
        %v649 = vpack.c.b16 %v638, %v637
        %v650 = vpack.c.b16 %v640, %v639
        %v651 = vpack.c.b16 %v642, %v641
        %v652 = vpack.c.b16 %v644, %v643
        %661 = vmatpush.bf16.msra.mxu0 %v652
        %662 = vmatpush.bf16.msra.mxu0 %v651
        %663 = vmatpush.bf16.msra.mxu0 %v650
        %664 = vmatpush.bf16.msra.mxu0 %v649
        %665 = vmatpush.bf16.msra.mxu0 %v648
        %666 = vmatpush.bf16.msra.mxu0 %v647
        %667 = vmatpush.bf16.msra.mxu0 %v646
        %668 = vmatpush.bf16.msra.mxu0 %v645
        %669 = vmatmul.bf16.gmra.mxu0 %v586
        %v670 = vpop.f32.mrf.mxu0
        %v671 = vadd.f32 %v612, %v670
        %v672 = vpop.f32.mrf.mxu0
        %v673 = vadd.f32 %v612, %v672
        %674 = vmatmul.bf16.gmra.mxu0 %v587
        %v675 = vpop.f32.mrf.mxu0
        %v676 = vadd.f32 %v612, %v675
        %v677 = vpop.f32.mrf.mxu0
        %v678 = vadd.f32 %v612, %v677
        %679 = vmatmul.bf16.gmra.mxu0 %v588
        %v680 = vpop.f32.mrf.mxu0
        %v681 = vadd.f32 %v612, %v680
        %v682 = vpop.f32.mrf.mxu0
        %v683 = vadd.f32 %v612, %v682
        %684 = vmatmul.bf16.gmra.mxu0 %v589
        %v685 = vpop.f32.mrf.mxu0
        %v686 = vadd.f32 %v612, %v685
        %v687 = vpop.f32.mrf.mxu0
        %v688 = vadd.f32 %v612, %v687
        %689 = vmatmul.bf16.gmra.mxu0 %v590
        %v690 = vpop.f32.mrf.mxu0
        %v691 = vadd.f32 %v612, %v690
        %v692 = vpop.f32.mrf.mxu0
        %v693 = vadd.f32 %v612, %v692
        %694 = vmatmul.bf16.gmra.mxu0 %v591
        %v695 = vpop.f32.mrf.mxu0
        %v696 = vadd.f32 %v612, %v695
        %v697 = vpop.f32.mrf.mxu0
        %v698 = vadd.f32 %v612, %v697
        %699 = vmatmul.bf16.gmra.mxu0 %v592
        %v700 = vpop.f32.mrf.mxu0
        %v701 = vadd.f32 %v612, %v700
        %v702 = vpop.f32.mrf.mxu0
        %v703 = vadd.f32 %v612, %v702
        %704 = vmatmul.bf16.gmra.mxu0 %v593
        %v705 = vpop.f32.mrf.mxu0
        %v706 = vadd.f32 %v612, %v705
        %v707 = vpop.f32.mrf.mxu0
        %v708 = vadd.f32 %v612, %v707
        %709 = vdwg.mxu0
        %v710 = vmax.f32 %v671, 0.0
        %v711 = vmax.f32 %v673, 0.0
        %v712 = vmax.f32 %v676, 0.0
        %v713 = vmax.f32 %v678, 0.0
        %v714 = vmax.f32 %v681, 0.0
        %v715 = vmax.f32 %v683, 0.0
        %v716 = vmax.f32 %v686, 0.0
        %v717 = vmax.f32 %v688, 0.0
        %v718 = vmax.f32 %v691, 0.0
        %v719 = vmax.f32 %v693, 0.0
        %v720 = vmax.f32 %v696, 0.0
        %v721 = vmax.f32 %v698, 0.0
        %v722 = vmax.f32 %v701, 0.0
        %v723 = vmax.f32 %v703, 0.0
        %v724 = vmax.f32 %v706, 0.0
        %v725 = vmax.f32 %v708, 0.0
        %v726 = vpack.c.bf16 %v710, %v710
        %v727 = vpack.c.bf16 %v711, %v711
        %v728 = vpack.c.bf16 %v712, %v712
        %v729 = vpack.c.bf16 %v713, %v713
        %v730 = vpack.c.bf16 %v714, %v714
        %v731 = vpack.c.bf16 %v715, %v715
        %v732 = vpack.c.bf16 %v716, %v716
        %v733 = vpack.c.bf16 %v717, %v717
        %v734 = vpack.c.bf16 %v718, %v718
        %v735 = vpack.c.bf16 %v719, %v719
        %v736 = vpack.c.bf16 %v720, %v720
        %v737 = vpack.c.bf16 %v721, %v721
        %v738 = vpack.c.bf16 %v722, %v722
        %v739 = vpack.c.bf16 %v723, %v723
        %v740 = vpack.c.bf16 %v724, %v724
        %v741 = vpack.c.bf16 %v725, %v725
        %v742 = vunpack.c.l.bf16 %v391
        %v743 = vunpack.c.l.bf16 %v392
        %v744 = vunpack.c.l.bf16 %v393
        %v745 = vunpack.c.l.bf16 %v394
        %v746 = vunpack.c.l.bf16 %v395
        %v747 = vunpack.c.l.bf16 %v396
        %v748 = vunpack.c.l.bf16 %v397
        %v749 = vunpack.c.l.bf16 %v398
        %v750 = vunpack.c.l.bf16 %v399
        %v751 = vunpack.c.l.bf16 %v400
        %v752 = vunpack.c.l.bf16 %v401
        %v753 = vunpack.c.l.bf16 %v402
        %v754 = vunpack.c.l.bf16 %v403
        %v755 = vunpack.c.l.bf16 %v404
        %v756 = vunpack.c.l.bf16 %v405
        %v757 = vunpack.c.l.bf16 %v406
        %v758 = vunpack.c.l.bf16 %v726
        %v759 = vunpack.c.l.bf16 %v727
        %v760 = vunpack.c.l.bf16 %v728
        %v761 = vunpack.c.l.bf16 %v729
        %v762 = vunpack.c.l.bf16 %v730
        %v763 = vunpack.c.l.bf16 %v731
        %v764 = vunpack.c.l.bf16 %v732
        %v765 = vunpack.c.l.bf16 %v733
        %v766 = vunpack.c.l.bf16 %v734
        %v767 = vunpack.c.l.bf16 %v735
        %v768 = vunpack.c.l.bf16 %v736
        %v769 = vunpack.c.l.bf16 %v737
        %v770 = vunpack.c.l.bf16 %v738
        %v771 = vunpack.c.l.bf16 %v739
        %v772 = vunpack.c.l.bf16 %v740
        %v773 = vunpack.c.l.bf16 %v741
        %v774 = vadd.f32 %v742, %v758
        %v775 = vadd.f32 %v743, %v759
        %v776 = vadd.f32 %v744, %v760
        %v777 = vadd.f32 %v745, %v761
        %v778 = vadd.f32 %v746, %v762
        %v779 = vadd.f32 %v747, %v763
        %v780 = vadd.f32 %v748, %v764
        %v781 = vadd.f32 %v749, %v765
        %v782 = vadd.f32 %v750, %v766
        %v783 = vadd.f32 %v751, %v767
        %v784 = vadd.f32 %v752, %v768
        %v785 = vadd.f32 %v753, %v769
        %v786 = vadd.f32 %v754, %v770
        %v787 = vadd.f32 %v755, %v771
        %v788 = vadd.f32 %v756, %v772
        %v789 = vadd.f32 %v757, %v773
        %v790 = vpack.c.bf16 %v774, %v774
        %v791 = vpack.c.bf16 %v775, %v775
        %v792 = vpack.c.bf16 %v776, %v776
        %v793 = vpack.c.bf16 %v777, %v777
        %v794 = vpack.c.bf16 %v778, %v778
        %v795 = vpack.c.bf16 %v779, %v779
        %v796 = vpack.c.bf16 %v780, %v780
        %v797 = vpack.c.bf16 %v781, %v781
        %v798 = vpack.c.bf16 %v782, %v782
        %v799 = vpack.c.bf16 %v783, %v783
        %v800 = vpack.c.bf16 %v784, %v784
        %v801 = vpack.c.bf16 %v785, %v785
        %v802 = vpack.c.bf16 %v786, %v786
        %v803 = vpack.c.bf16 %v787, %v787
        %v804 = vpack.c.bf16 %v788, %v788
        %v805 = vpack.c.bf16 %v789, %v789
        %s806 = scalar_lea.vmem %s2, 128
        %v807 = vld [vmem:[%s806] sm:$0xf]
        %v808 = vld [vmem:[%s806 + $0x4] sm:$0xf]
        %v809 = vld [vmem:[%s806 + $0x8] sm:$0xf]
        %v810 = vld [vmem:[%s806 + $0xc] sm:$0xf]
        %v811 = vld [vmem:[%s806 + $0x10] sm:$0xf]
        %v812 = vld [vmem:[%s806 + $0x14] sm:$0xf]
        %v813 = vld [vmem:[%s806 + $0x18] sm:$0xf]
        %v814 = vld [vmem:[%s806 + $0x1c] sm:$0xf]
        %v815 = vld [vmem:[%s806 + $0x20] sm:$0xf]
        %v816 = vld [vmem:[%s806 + $0x24] sm:$0xf]
        %v817 = vld [vmem:[%s806 + $0x28] sm:$0xf]
        %v818 = vld [vmem:[%s806 + $0x2c] sm:$0xf]
        %v819 = vld [vmem:[%s806 + $0x30] sm:$0xf]
        %v820 = vld [vmem:[%s806 + $0x34] sm:$0xf]
        %v821 = vld [vmem:[%s806 + $0x38] sm:$0xf]
        %v822 = vld [vmem:[%s806 + $0x3c] sm:$0xf]
        %v823 = vld [vmem:[#allocation5 + $0x3] sm:$0x1]
        %v824 = vperm.slane %v823, 0
        %v841 = vunpack.c.l.b16 %v790
        %v842 = vunpack.c.l.b16 %v791
        %v843 = vunpack.c.l.b16 %v792
        %v844 = vunpack.c.l.b16 %v793
        %v845 = vunpack.c.l.b16 %v794
        %v846 = vunpack.c.l.b16 %v795
        %v847 = vunpack.c.l.b16 %v796
        %v848 = vunpack.c.l.b16 %v797
        %v849 = vunpack.c.l.b16 %v798
        %v850 = vunpack.c.l.b16 %v799
        %v851 = vunpack.c.l.b16 %v800
        %v852 = vunpack.c.l.b16 %v801
        %v853 = vunpack.c.l.b16 %v802
        %v854 = vunpack.c.l.b16 %v803
        %v855 = vunpack.c.l.b16 %v804
        %v856 = vunpack.c.l.b16 %v805
        %v857 = vpack.c.b16 %v842, %v841
        %v858 = vpack.c.b16 %v844, %v843
        %v859 = vpack.c.b16 %v846, %v845
        %v860 = vpack.c.b16 %v848, %v847
        %v861 = vpack.c.b16 %v850, %v849
        %v862 = vpack.c.b16 %v852, %v851
        %v863 = vpack.c.b16 %v854, %v853
        %v864 = vpack.c.b16 %v856, %v855
        %v889 = vunpack.c.l.b16 %v807
        %v890 = vunpack.c.l.b16 %v808
        %v891 = vunpack.c.l.b16 %v809
        %v892 = vunpack.c.l.b16 %v810
        %v893 = vunpack.c.l.b16 %v811
        %v894 = vunpack.c.l.b16 %v812
        %v895 = vunpack.c.l.b16 %v813
        %v896 = vunpack.c.l.b16 %v814
        %v897 = vunpack.c.l.b16 %v815
        %v898 = vunpack.c.l.b16 %v816
        %v899 = vunpack.c.l.b16 %v817
        %v900 = vunpack.c.l.b16 %v818
        %v901 = vunpack.c.l.b16 %v819
        %v902 = vunpack.c.l.b16 %v820
        %v903 = vunpack.c.l.b16 %v821
        %v904 = vunpack.c.l.b16 %v822
        %v905 = vpack.c.b16 %v890, %v889
        %v906 = vpack.c.b16 %v892, %v891
        %v907 = vpack.c.b16 %v894, %v893
        %v908 = vpack.c.b16 %v896, %v895
        %v909 = vpack.c.b16 %v898, %v897
        %v910 = vpack.c.b16 %v900, %v899
        %v911 = vpack.c.b16 %v902, %v901
        %v912 = vpack.c.b16 %v904, %v903
        %921 = vmatpush.bf16.msra.mxu0 %v912
        %922 = vmatpush.bf16.msra.mxu0 %v911
        %923 = vmatpush.bf16.msra.mxu0 %v910
        %924 = vmatpush.bf16.msra.mxu0 %v909
        %925 = vmatpush.bf16.msra.mxu0 %v908
        %926 = vmatpush.bf16.msra.mxu0 %v907
        %927 = vmatpush.bf16.msra.mxu0 %v906
        %928 = vmatpush.bf16.msra.mxu0 %v905
        %929 = vmatmul.bf16.gmra.mxu0 %v857
        %v930 = vpop.f32.mrf.mxu0
        %v931 = vadd.f32 %v824, %v930
        %v932 = vpop.f32.mrf.mxu0
        %v933 = vadd.f32 %v824, %v932
        %934 = vmatmul.bf16.gmra.mxu0 %v858
        %v935 = vpop.f32.mrf.mxu0
        %v936 = vadd.f32 %v824, %v935
        %v937 = vpop.f32.mrf.mxu0
        %v938 = vadd.f32 %v824, %v937
        %939 = vmatmul.bf16.gmra.mxu0 %v859
        %v940 = vpop.f32.mrf.mxu0
        %v941 = vadd.f32 %v824, %v940
        %v942 = vpop.f32.mrf.mxu0
        %v943 = vadd.f32 %v824, %v942
        %944 = vmatmul.bf16.gmra.mxu0 %v860
        %v945 = vpop.f32.mrf.mxu0
        %v946 = vadd.f32 %v824, %v945
        %v947 = vpop.f32.mrf.mxu0
        %v948 = vadd.f32 %v824, %v947
        %949 = vmatmul.bf16.gmra.mxu0 %v861
        %v950 = vpop.f32.mrf.mxu0
        %v951 = vadd.f32 %v824, %v950
        %v952 = vpop.f32.mrf.mxu0
        %v953 = vadd.f32 %v824, %v952
        %954 = vmatmul.bf16.gmra.mxu0 %v862
        %v955 = vpop.f32.mrf.mxu0
        %v956 = vadd.f32 %v824, %v955
        %v957 = vpop.f32.mrf.mxu0
        %v958 = vadd.f32 %v824, %v957
        %959 = vmatmul.bf16.gmra.mxu0 %v863
        %v960 = vpop.f32.mrf.mxu0
        %v961 = vadd.f32 %v824, %v960
        %v962 = vpop.f32.mrf.mxu0
        %v963 = vadd.f32 %v824, %v962
        %964 = vmatmul.bf16.gmra.mxu0 %v864
        %v965 = vpop.f32.mrf.mxu0
        %v966 = vadd.f32 %v824, %v965
        %v967 = vpop.f32.mrf.mxu0
        %v968 = vadd.f32 %v824, %v967
        %969 = vdwg.mxu0
        %v970 = vmax.f32 %v931, 0.0
        %v971 = vmax.f32 %v933, 0.0
        %v972 = vmax.f32 %v936, 0.0
        %v973 = vmax.f32 %v938, 0.0
        %v974 = vmax.f32 %v941, 0.0
        %v975 = vmax.f32 %v943, 0.0
        %v976 = vmax.f32 %v946, 0.0
        %v977 = vmax.f32 %v948, 0.0
        %v978 = vmax.f32 %v951, 0.0
        %v979 = vmax.f32 %v953, 0.0
        %v980 = vmax.f32 %v956, 0.0
        %v981 = vmax.f32 %v958, 0.0
        %v982 = vmax.f32 %v961, 0.0
        %v983 = vmax.f32 %v963, 0.0
        %v984 = vmax.f32 %v966, 0.0
        %v985 = vmax.f32 %v968, 0.0
        %v986 = vpack.c.bf16 %v971, %v970
        %v987 = vpack.c.bf16 %v973, %v972
        %v988 = vpack.c.bf16 %v975, %v974
        %v989 = vpack.c.bf16 %v977, %v976
        %v990 = vpack.c.bf16 %v979, %v978
        %v991 = vpack.c.bf16 %v981, %v980
        %v992 = vpack.c.bf16 %v983, %v982
        %v993 = vpack.c.bf16 %v985, %v984
        %s994 = scalar_lea.vmem %s2, 192
        %v995 = vld [vmem:[%s994] sm:$0xf]
        %v996 = vld [vmem:[%s994 + $0x4] sm:$0xf]
        %v997 = vld [vmem:[%s994 + $0x8] sm:$0xf]
        %v998 = vld [vmem:[%s994 + $0xc] sm:$0xf]
        %v999 = vld [vmem:[%s994 + $0x10] sm:$0xf]
        %v1000 = vld [vmem:[%s994 + $0x14] sm:$0xf]
        %v1001 = vld [vmem:[%s994 + $0x18] sm:$0xf]
        %v1002 = vld [vmem:[%s994 + $0x1c] sm:$0xf]
        %v1003 = vld [vmem:[%s994 + $0x20] sm:$0xf]
        %v1004 = vld [vmem:[%s994 + $0x24] sm:$0xf]
        %v1005 = vld [vmem:[%s994 + $0x28] sm:$0xf]
        %v1006 = vld [vmem:[%s994 + $0x2c] sm:$0xf]
        %v1007 = vld [vmem:[%s994 + $0x30] sm:$0xf]
        %v1008 = vld [vmem:[%s994 + $0x34] sm:$0xf]
        %v1009 = vld [vmem:[%s994 + $0x38] sm:$0xf]
        %v1010 = vld [vmem:[%s994 + $0x3c] sm:$0xf]
        %v1011 = vld [vmem:[#allocation5 + $0x4] sm:$0x1]
        %v1012 = vperm.slane %v1011, 0
        %v1029 = vunpack.c.l.b16 %v995
        %v1030 = vunpack.c.l.b16 %v996
        %v1031 = vunpack.c.l.b16 %v997
        %v1032 = vunpack.c.l.b16 %v998
        %v1033 = vunpack.c.l.b16 %v999
        %v1034 = vunpack.c.l.b16 %v1000
        %v1035 = vunpack.c.l.b16 %v1001
        %v1036 = vunpack.c.l.b16 %v1002
        %v1037 = vunpack.c.l.b16 %v1003
        %v1038 = vunpack.c.l.b16 %v1004
        %v1039 = vunpack.c.l.b16 %v1005
        %v1040 = vunpack.c.l.b16 %v1006
        %v1041 = vunpack.c.l.b16 %v1007
        %v1042 = vunpack.c.l.b16 %v1008
        %v1043 = vunpack.c.l.b16 %v1009
        %v1044 = vunpack.c.l.b16 %v1010
        %v1045 = vpack.c.b16 %v1030, %v1029
        %v1046 = vpack.c.b16 %v1032, %v1031
        %v1047 = vpack.c.b16 %v1034, %v1033
        %v1048 = vpack.c.b16 %v1036, %v1035
        %v1049 = vpack.c.b16 %v1038, %v1037
        %v1050 = vpack.c.b16 %v1040, %v1039
        %v1051 = vpack.c.b16 %v1042, %v1041
        %v1052 = vpack.c.b16 %v1044, %v1043
        %1061 = vmatpush.bf16.msra.mxu0 %v1052
        %1062 = vmatpush.bf16.msra.mxu0 %v1051
        %1063 = vmatpush.bf16.msra.mxu0 %v1050
        %1064 = vmatpush.bf16.msra.mxu0 %v1049
        %1065 = vmatpush.bf16.msra.mxu0 %v1048
        %1066 = vmatpush.bf16.msra.mxu0 %v1047
        %1067 = vmatpush.bf16.msra.mxu0 %v1046
        %1068 = vmatpush.bf16.msra.mxu0 %v1045
        %1069 = vmatmul.bf16.gmra.mxu0 %v986
        %v1070 = vpop.f32.mrf.mxu0
        %v1071 = vadd.f32 %v1012, %v1070
        %v1072 = vpop.f32.mrf.mxu0
        %v1073 = vadd.f32 %v1012, %v1072
        %1074 = vmatmul.bf16.gmra.mxu0 %v987
        %v1075 = vpop.f32.mrf.mxu0
        %v1076 = vadd.f32 %v1012, %v1075
        %v1077 = vpop.f32.mrf.mxu0
        %v1078 = vadd.f32 %v1012, %v1077
        %1079 = vmatmul.bf16.gmra.mxu0 %v988
        %v1080 = vpop.f32.mrf.mxu0
        %v1081 = vadd.f32 %v1012, %v1080
        %v1082 = vpop.f32.mrf.mxu0
        %v1083 = vadd.f32 %v1012, %v1082
        %1084 = vmatmul.bf16.gmra.mxu0 %v989
        %v1085 = vpop.f32.mrf.mxu0
        %v1086 = vadd.f32 %v1012, %v1085
        %v1087 = vpop.f32.mrf.mxu0
        %v1088 = vadd.f32 %v1012, %v1087
        %1089 = vmatmul.bf16.gmra.mxu0 %v990
        %v1090 = vpop.f32.mrf.mxu0
        %v1091 = vadd.f32 %v1012, %v1090
        %v1092 = vpop.f32.mrf.mxu0
        %v1093 = vadd.f32 %v1012, %v1092
        %1094 = vmatmul.bf16.gmra.mxu0 %v991
        %v1095 = vpop.f32.mrf.mxu0
        %v1096 = vadd.f32 %v1012, %v1095
        %v1097 = vpop.f32.mrf.mxu0
        %v1098 = vadd.f32 %v1012, %v1097
        %1099 = vmatmul.bf16.gmra.mxu0 %v992
        %v1100 = vpop.f32.mrf.mxu0
        %v1101 = vadd.f32 %v1012, %v1100
        %v1102 = vpop.f32.mrf.mxu0
        %v1103 = vadd.f32 %v1012, %v1102
        %1104 = vmatmul.bf16.gmra.mxu0 %v993
        %v1105 = vpop.f32.mrf.mxu0
        %v1106 = vadd.f32 %v1012, %v1105
        %v1107 = vpop.f32.mrf.mxu0
        %v1108 = vadd.f32 %v1012, %v1107
        %1109 = vdwg.mxu0
        %v1110 = vmax.f32 %v1071, 0.0
        %v1111 = vmax.f32 %v1073, 0.0
        %v1112 = vmax.f32 %v1076, 0.0
        %v1113 = vmax.f32 %v1078, 0.0
        %v1114 = vmax.f32 %v1081, 0.0
        %v1115 = vmax.f32 %v1083, 0.0
        %v1116 = vmax.f32 %v1086, 0.0
        %v1117 = vmax.f32 %v1088, 0.0
        %v1118 = vmax.f32 %v1091, 0.0
        %v1119 = vmax.f32 %v1093, 0.0
        %v1120 = vmax.f32 %v1096, 0.0
        %v1121 = vmax.f32 %v1098, 0.0
        %v1122 = vmax.f32 %v1101, 0.0
        %v1123 = vmax.f32 %v1103, 0.0
        %v1124 = vmax.f32 %v1106, 0.0
        %v1125 = vmax.f32 %v1108, 0.0
        %v1126 = vpack.c.bf16 %v1110, %v1110
        %v1127 = vpack.c.bf16 %v1111, %v1111
        %v1128 = vpack.c.bf16 %v1112, %v1112
        %v1129 = vpack.c.bf16 %v1113, %v1113
        %v1130 = vpack.c.bf16 %v1114, %v1114
        %v1131 = vpack.c.bf16 %v1115, %v1115
        %v1132 = vpack.c.bf16 %v1116, %v1116
        %v1133 = vpack.c.bf16 %v1117, %v1117
        %v1134 = vpack.c.bf16 %v1118, %v1118
        %v1135 = vpack.c.bf16 %v1119, %v1119
        %v1136 = vpack.c.bf16 %v1120, %v1120
        %v1137 = vpack.c.bf16 %v1121, %v1121
        %v1138 = vpack.c.bf16 %v1122, %v1122
        %v1139 = vpack.c.bf16 %v1123, %v1123
        %v1140 = vpack.c.bf16 %v1124, %v1124
        %v1141 = vpack.c.bf16 %v1125, %v1125
        %v1142 = vunpack.c.l.bf16 %v790
        %v1143 = vunpack.c.l.bf16 %v791
        %v1144 = vunpack.c.l.bf16 %v792
        %v1145 = vunpack.c.l.bf16 %v793
        %v1146 = vunpack.c.l.bf16 %v794
        %v1147 = vunpack.c.l.bf16 %v795
        %v1148 = vunpack.c.l.bf16 %v796
        %v1149 = vunpack.c.l.bf16 %v797
        %v1150 = vunpack.c.l.bf16 %v798
        %v1151 = vunpack.c.l.bf16 %v799
        %v1152 = vunpack.c.l.bf16 %v800
        %v1153 = vunpack.c.l.bf16 %v801
        %v1154 = vunpack.c.l.bf16 %v802
        %v1155 = vunpack.c.l.bf16 %v803
        %v1156 = vunpack.c.l.bf16 %v804
        %v1157 = vunpack.c.l.bf16 %v805
        %v1158 = vunpack.c.l.bf16 %v1126
        %v1159 = vunpack.c.l.bf16 %v1127
        %v1160 = vunpack.c.l.bf16 %v1128
        %v1161 = vunpack.c.l.bf16 %v1129
        %v1162 = vunpack.c.l.bf16 %v1130
        %v1163 = vunpack.c.l.bf16 %v1131
        %v1164 = vunpack.c.l.bf16 %v1132
        %v1165 = vunpack.c.l.bf16 %v1133
        %v1166 = vunpack.c.l.bf16 %v1134
        %v1167 = vunpack.c.l.bf16 %v1135
        %v1168 = vunpack.c.l.bf16 %v1136
        %v1169 = vunpack.c.l.bf16 %v1137
        %v1170 = vunpack.c.l.bf16 %v1138
        %v1171 = vunpack.c.l.bf16 %v1139
        %v1172 = vunpack.c.l.bf16 %v1140
        %v1173 = vunpack.c.l.bf16 %v1141
        %v1174 = vadd.f32 %v1142, %v1158
        %v1175 = vadd.f32 %v1143, %v1159
        %v1176 = vadd.f32 %v1144, %v1160
        %v1177 = vadd.f32 %v1145, %v1161
        %v1178 = vadd.f32 %v1146, %v1162
        %v1179 = vadd.f32 %v1147, %v1163
        %v1180 = vadd.f32 %v1148, %v1164
        %v1181 = vadd.f32 %v1149, %v1165
        %v1182 = vadd.f32 %v1150, %v1166
        %v1183 = vadd.f32 %v1151, %v1167
        %v1184 = vadd.f32 %v1152, %v1168
        %v1185 = vadd.f32 %v1153, %v1169
        %v1186 = vadd.f32 %v1154, %v1170
        %v1187 = vadd.f32 %v1155, %v1171
        %v1188 = vadd.f32 %v1156, %v1172
        %v1189 = vadd.f32 %v1157, %v1173
        %v1190 = vpack.c.bf16 %v1175, %v1174
        %v1191 = vpack.c.bf16 %v1177, %v1176
        %v1192 = vpack.c.bf16 %v1179, %v1178
        %v1193 = vpack.c.bf16 %v1181, %v1180
        %v1194 = vpack.c.bf16 %v1183, %v1182
        %v1195 = vpack.c.bf16 %v1185, %v1184
        %v1196 = vpack.c.bf16 %v1187, %v1186
        %v1197 = vpack.c.bf16 %v1189, %v1188
        %v1198 = vld [vmem:[%s3] sm:$0xf]
        %v1199 = vld [vmem:[%s3 + $0x4] sm:$0xf]
        %v1200 = vld [vmem:[%s3 + $0x8] sm:$0xf]
        %v1201 = vld [vmem:[%s3 + $0xc] sm:$0xf]
        %v1202 = vld [vmem:[%s3 + $0x10] sm:$0xf]
        %v1203 = vld [vmem:[%s3 + $0x14] sm:$0xf]
        %v1204 = vld [vmem:[%s3 + $0x18] sm:$0xf]
        %v1205 = vld [vmem:[%s3 + $0x1c] sm:$0xf]
        %v1206 = vld [vmem:[%s3 + $0x20] sm:$0xf]
        %v1207 = vld [vmem:[%s3 + $0x24] sm:$0xf]
        %v1208 = vld [vmem:[%s3 + $0x28] sm:$0xf]
        %v1209 = vld [vmem:[%s3 + $0x2c] sm:$0xf]
        %v1210 = vld [vmem:[%s3 + $0x30] sm:$0xf]
        %v1211 = vld [vmem:[%s3 + $0x34] sm:$0xf]
        %v1212 = vld [vmem:[%s3 + $0x38] sm:$0xf]
        %v1213 = vld [vmem:[%s3 + $0x3c] sm:$0xf]
        %v1214 = vld [vmem:[#allocation5 + $0x5] sm:$0x1]
        %v1215 = vperm.slane %v1214, 0
        %v1232 = vunpack.c.l.b16 %v1198
        %v1233 = vunpack.c.l.b16 %v1199
        %v1234 = vunpack.c.l.b16 %v1200
        %v1235 = vunpack.c.l.b16 %v1201
        %v1236 = vunpack.c.l.b16 %v1202
        %v1237 = vunpack.c.l.b16 %v1203
        %v1238 = vunpack.c.l.b16 %v1204
        %v1239 = vunpack.c.l.b16 %v1205
        %v1240 = vunpack.c.l.b16 %v1206
        %v1241 = vunpack.c.l.b16 %v1207
        %v1242 = vunpack.c.l.b16 %v1208
        %v1243 = vunpack.c.l.b16 %v1209
        %v1244 = vunpack.c.l.b16 %v1210
        %v1245 = vunpack.c.l.b16 %v1211
        %v1246 = vunpack.c.l.b16 %v1212
        %v1247 = vunpack.c.l.b16 %v1213
        %v1248 = vpack.c.b16 %v1233, %v1232
        %v1249 = vpack.c.b16 %v1235, %v1234
        %v1250 = vpack.c.b16 %v1237, %v1236
        %v1251 = vpack.c.b16 %v1239, %v1238
        %v1252 = vpack.c.b16 %v1241, %v1240
        %v1253 = vpack.c.b16 %v1243, %v1242
        %v1254 = vpack.c.b16 %v1245, %v1244
        %v1255 = vpack.c.b16 %v1247, %v1246
        %1264 = vmatpush.bf16.msra.mxu0 %v1255
        %1265 = vmatpush.bf16.msra.mxu0 %v1254
        %1266 = vmatpush.bf16.msra.mxu0 %v1253
        %1267 = vmatpush.bf16.msra.mxu0 %v1252
        %1268 = vmatpush.bf16.msra.mxu0 %v1251
        %1269 = vmatpush.bf16.msra.mxu0 %v1250
        %1270 = vmatpush.bf16.msra.mxu0 %v1249
        %1271 = vmatpush.bf16.msra.mxu0 %v1248
        %1272 = vmatmul.bf16.gmra.mxu0 %v1190
        %v1273 = vpop.f32.mrf.mxu0
        %v1274 = vadd.f32 %v1215, %v1273
        %v1275 = vpop.f32.mrf.mxu0
        %v1276 = vadd.f32 %v1215, %v1275
        %1277 = vmatmul.bf16.gmra.mxu0 %v1191
        %v1278 = vpop.f32.mrf.mxu0
        %v1279 = vadd.f32 %v1215, %v1278
        %v1280 = vpop.f32.mrf.mxu0
        %v1281 = vadd.f32 %v1215, %v1280
        %1282 = vmatmul.bf16.gmra.mxu0 %v1192
        %v1283 = vpop.f32.mrf.mxu0
        %v1284 = vadd.f32 %v1215, %v1283
        %v1285 = vpop.f32.mrf.mxu0
        %v1286 = vadd.f32 %v1215, %v1285
        %1287 = vmatmul.bf16.gmra.mxu0 %v1193
        %v1288 = vpop.f32.mrf.mxu0
        %v1289 = vadd.f32 %v1215, %v1288
        %v1290 = vpop.f32.mrf.mxu0
        %v1291 = vadd.f32 %v1215, %v1290
        %1292 = vmatmul.bf16.gmra.mxu0 %v1194
        %v1293 = vpop.f32.mrf.mxu0
        %v1294 = vadd.f32 %v1215, %v1293
        %v1295 = vpop.f32.mrf.mxu0
        %v1296 = vadd.f32 %v1215, %v1295
        %1297 = vmatmul.bf16.gmra.mxu0 %v1195
        %v1298 = vpop.f32.mrf.mxu0
        %v1299 = vadd.f32 %v1215, %v1298
        %v1300 = vpop.f32.mrf.mxu0
        %v1301 = vadd.f32 %v1215, %v1300
        %1302 = vmatmul.bf16.gmra.mxu0 %v1196
        %v1303 = vpop.f32.mrf.mxu0
        %v1304 = vadd.f32 %v1215, %v1303
        %v1305 = vpop.f32.mrf.mxu0
        %v1306 = vadd.f32 %v1215, %v1305
        %1307 = vmatmul.bf16.gmra.mxu0 %v1197
        %v1308 = vpop.f32.mrf.mxu0
        %v1309 = vadd.f32 %v1215, %v1308
        %v1310 = vpop.f32.mrf.mxu0
        %v1311 = vadd.f32 %v1215, %v1310
        %1312 = vdwg.mxu0
        %1313 = vst [vmem:[%s250] sm:$0xff] %v1274
        %1314 = vst [vmem:[%s250 + $0x8] sm:$0xff] %v1276
        %1315 = vst [vmem:[%s250 + $0x10] sm:$0xff] %v1279
        %1316 = vst [vmem:[%s250 + $0x18] sm:$0xff] %v1281
        %1317 = vst [vmem:[%s250 + $0x20] sm:$0xff] %v1284
        %1318 = vst [vmem:[%s250 + $0x28] sm:$0xff] %v1286
        %1319 = vst [vmem:[%s250 + $0x30] sm:$0xff] %v1289
        %1320 = vst [vmem:[%s250 + $0x38] sm:$0xff] %v1291
        %1321 = vst [vmem:[%s250 + $0x40] sm:$0xff] %v1294
        %1322 = vst [vmem:[%s250 + $0x48] sm:$0xff] %v1296
        %1323 = vst [vmem:[%s250 + $0x50] sm:$0xff] %v1299
        %1324 = vst [vmem:[%s250 + $0x58] sm:$0xff] %v1301
        %1325 = vst [vmem:[%s250 + $0x60] sm:$0xff] %v1304
        %1326 = vst [vmem:[%s250 + $0x68] sm:$0xff] %v1306
        %1327 = vst [vmem:[%s250 + $0x70] sm:$0xff] %v1309
        %1328 = vst [vmem:[%s250 + $0x78] sm:$0xff] %v1311
        %s1329 = sand.u32 %s139, 1
        %s1330 = scalar_lea.sflag [#allocation4], %s1329
        %s1331 = sand.u32 %s139, 1
        %s1332 = smul.addr %s1331, 128
        %s1333 = scalar_lea.vmem [#allocation7], %s1332
        // Predicated region
        $region49: #{tpu_custom_call.1} parent=39 // pred_check
          %p1334 = pneg %p149
        $region50: #{tpu_custom_call.1} parent=39 // pred_check_branch
          %1336 = sbr.rel (%p1334) target = $region52
        $region51: #{tpu_custom_call.1} parent=39 // pred_region
          %s1337 = smul.u32 16, %s21
          %1339 = vsyncadd %s1330, 0
          %s1340 = smul.addr %s1337, 8
          %s1341 = scalar_lea.hbm %s5, %s1340
          %s1342 = sshll.u32 %s1333, 4
          %s1343 = int_to_ptr.vmem [resolvable:$true] %s1342
          %s1344 = sshll.u32 %s1341, 4
          %s1345 = int_to_ptr.hbm [resolvable:$true] %s1344
          %1350 = dma.vmem_to_hbm [thread:$0]  %s1343, 2048, %s1345, %s1330, 128, 128, 8
        $region52: #{tpu_custom_call.1} parent=39 // pred_fallthru
          _
      $region40: #{tpu_custom_call.1} parent=5 // pred_fallthru
        _
      %p1351 = scmp.le.s32.totalorder 2, %s16
      // Predicated region
      $region53: #{tpu_custom_call.1} parent=5 // pred_check
        %p1352 = pneg %p1351
      $region54: #{tpu_custom_call.1} parent=5 // pred_check_branch
        %1354 = sbr.rel (%p1352) target = $region56
      $region55: #{tpu_custom_call.1} parent=5 // pred_region
        %s1355 = ssub.s32 %s16, 2
        // Predicated region
        $region57: #{tpu_custom_call.1} parent=55 // pred_check
          %p1356 = pneg %p155
        $region58: #{tpu_custom_call.1} parent=55 // pred_check_branch
          %1358 = sbr.rel (%p1356) target = $region60
        $region59: #{tpu_custom_call.1} parent=55 // pred_region
          %s1359 = sand.u32 %s140, 1
          %s1360 = scalar_lea.sflag [#allocation4], %s1359
          %s1361 = sand.u32 %s140, 1
          %s1362 = smul.addr %s1361, 128
          %s1363 = scalar_lea.vmem [#allocation7], %s1362
          %1365 = dma.done %s1360, 2048
        $region60: #{tpu_custom_call.1} parent=55 // pred_fallthru
          _
      $region56: #{tpu_custom_call.1} parent=5 // pred_fallthru
        _
    $region6: #{tpu_custom_call.1} parent=1 // loop_footer
      %s20 = sadd.s32 1, %s16
    $region7: #{tpu_custom_call.1} parent=1 // loop_footer_branch
      %15 = sbr.rel target = $region3
    $region8: #{tpu_custom_call.1} parent=1 // loop_exit
      _
    %1366 = vsyncpa [#allocation3], 1
    %s1367 = scalar_lea.sflag [#allocation3], 1
    %1368 = vsyncpa %s1367, 1
    %1369 = vsyncpa [#allocation6], 1
    %1370 = vsyncpa [#allocation4], 1
    %s1371 = scalar_lea.sflag [#allocation4], 1
    %1372 = vsyncpa %s1371, 1

</llo_original>
